<compile_context>
chip_gen: v6e
topology: v6e:2x2x1
jax: 0.10.0
libtpu: 0.0.40
codegen_flags: <defaults>
</compile_context>

<pallas_src>
import functools
import math

import jax
import jax.numpy as jnp
from jax import lax
from jax.experimental import pallas as pl
from jax.experimental.pallas import tpu as pltpu


# ---------------------------------------------------------------------------
# Hardware / tiling helpers
# ---------------------------------------------------------------------------

def _vmem_limit_bytes():
    """Generation-aware scoped-VMEM limit (~7/8 of physical capacity).

    v7x: 64 MiB physical -> ~56 MiB; v5e/v6e: 128 MiB -> ~112 MiB.
    The narrow try/except only guards the hardware query (non-TPU / interpret
    contexts fall back to the smallest-VMEM generation); it never masks kernel
    lowering or compile errors.
    """
    try:
        cap = int(pltpu.get_tpu_info().vmem_capacity_bytes)
    except Exception:
        cap = 64 * 1024 * 1024
    return cap * 7 // 8


def _pick_tile(total, target, mult):
    """Largest divisor of `total` that is <= target and a multiple of `mult`.

    Falls back to `total` (a full-extent block is always legal) when no such
    divisor exists — tiny / odd shapes then simply run untiled.
    """
    if total <= target:
        return total
    d = target - (target % mult)
    while d >= mult:
        if total % d == 0:
            return d
        d -= mult
    return total


def _layernorm(y, gamma, beta, eps=1e-5):
    mu = jnp.mean(y, axis=-1, keepdims=True)
    var = jnp.mean((y - mu) ** 2, axis=-1, keepdims=True)
    return (y - mu) * lax.rsqrt(var + eps) * gamma + beta


# ---------------------------------------------------------------------------
# Kernel 1: fused Q/K/V projection (softmax scale pre-folded into Wq / bq)
# ---------------------------------------------------------------------------

def _qkv_kernel(x_ref, wq_ref, wk_ref, wv_ref, bq_ref, bk_ref, bv_ref,
                q_ref, k_ref, v_ref):
    x = x_ref[...].astype(jnp.bfloat16)                       # (TS, E) bf16 MXU operand
    q = jnp.dot(x, wq_ref[...], preferred_element_type=jnp.float32) + bq_ref[...]
    k = jnp.dot(x, wk_ref[...], preferred_element_type=jnp.float32) + bk_ref[...]
    v = jnp.dot(x, wv_ref[...], preferred_element_type=jnp.float32) + bv_ref[...]
    # Cast ONCE on the full (TS, E) tensors (no per-head slice casts downstream).
    q_ref[...] = q.astype(q_ref.dtype)
    k_ref[...] = k.astype(k_ref.dtype)
    v_ref[...] = v.astype(v_ref.dtype)


def _qkv_proj(x, p, ts):
    B, S, E = x.shape

    def act_spec():
        return pl.BlockSpec((None, ts, E), lambda b, s: (b, s, 0))

    def const_spec(shape):
        return pl.BlockSpec(shape, lambda b, s: (0, 0))

    out_sds = jax.ShapeDtypeStruct((B, S, E), jnp.bfloat16)
    return pl.pallas_call(
        _qkv_kernel,
        out_shape=(out_sds, out_sds, out_sds),
        grid_spec=pltpu.PrefetchScalarGridSpec(
            num_scalar_prefetch=0,
            grid=(B, S // ts),
            in_specs=[act_spec(),
                      const_spec(p["wq"].shape), const_spec(p["wk"].shape),
                      const_spec(p["wv"].shape),
                      const_spec(p["bq"].shape), const_spec(p["bk"].shape),
                      const_spec(p["bv"].shape)],
            out_specs=(act_spec(), act_spec(), act_spec()),
        ),
        compiler_params=pltpu.CompilerParams(
            dimension_semantics=("parallel", "parallel"),
            vmem_limit_bytes=_vmem_limit_bytes(),
        ),
    )(x, p["wq"], p["wk"], p["wv"], p["bq"], p["bk"], p["bv"])


# ---------------------------------------------------------------------------
# Kernel 2: flash attention (online softmax over KV tiles, per batch*head)
# ---------------------------------------------------------------------------

def _flash_kernel(q_ref, k_ref, v_ref, o_ref, m_scr, l_scr, acc_scr):
    ki = pl.program_id(2)

    @pl.when(ki == 0)
    def _():
        m_scr[...] = jnp.full(m_scr.shape, -jnp.inf, dtype=m_scr.dtype)
        l_scr[...] = jnp.zeros(l_scr.shape, dtype=l_scr.dtype)
        acc_scr[...] = jnp.zeros(acc_scr.shape, dtype=acc_scr.dtype)

    # scores: (TQ, D) x (TK, D), contract D directly (A @ B^T, no materialized .T)
    s = lax.dot_general(q_ref[...], k_ref[...], (((1,), (1,)), ((), ())),
                        preferred_element_type=jnp.float32)    # (TQ, TK) f32

    m_prev = m_scr[...]
    m_new = jnp.maximum(m_prev, jnp.max(s, axis=-1, keepdims=True))
    alpha = jnp.exp(m_prev - m_new)
    p = jnp.exp(s - m_new)
    l_scr[...] = alpha * l_scr[...] + jnp.sum(p, axis=-1, keepdims=True)
    acc_scr[...] = alpha * acc_scr[...] + jnp.dot(
        p.astype(jnp.bfloat16), v_ref[...], preferred_element_type=jnp.float32)
    m_scr[...] = m_new

    @pl.when(ki == pl.num_programs(2) - 1)
    def _():
        # approx reciprocal runs on the EUP slot; tiny deviation vs exact division
        # (acceptable for inference, same as the previously validated kernel).
        o_ref[...] = (acc_scr[...] *
                      pl.reciprocal(l_scr[...], approx=True)).astype(o_ref.dtype)


def _flash_attention(q, k, v, tq, tk):
    BH, S, D = q.shape
    q_spec = pl.BlockSpec((None, tq, D), lambda bh, qi, ki: (bh, qi, 0))
    k_spec = pl.BlockSpec((None, tk, D), lambda bh, qi, ki: (bh, ki, 0))
    v_spec = pl.BlockSpec((None, tk, D), lambda bh, qi, ki: (bh, ki, 0))
    o_spec = pl.BlockSpec((None, tq, D), lambda bh, qi, ki: (bh, qi, 0))
    return pl.pallas_call(
        _flash_kernel,
        out_shape=jax.ShapeDtypeStruct((BH, S, D), jnp.bfloat16),
        grid_spec=pltpu.PrefetchScalarGridSpec(
            num_scalar_prefetch=0,
            grid=(BH, S // tq, S // tk),
            in_specs=[q_spec, k_spec, v_spec],
            out_specs=o_spec,
            scratch_shapes=[pltpu.VMEM((tq, 1), jnp.float32),   # running max
                            pltpu.VMEM((tq, 1), jnp.float32),   # running sum
                            pltpu.VMEM((tq, D), jnp.float32)],  # output accumulator
        ),
        compiler_params=pltpu.CompilerParams(
            dimension_semantics=("parallel", "parallel", "arbitrary"),
            vmem_limit_bytes=_vmem_limit_bytes(),
        ),
    )(q, k, v)


# ---------------------------------------------------------------------------
# Kernel 3: out-proj + residual/LN1, then FFN streamed over F chunks + residual/LN2
# ---------------------------------------------------------------------------

def _out_ffn_kernel(ctx_ref, x_ref, wo_ref, bo_ref, g1_ref, be1_ref,
                    w1_ref, b1_ref, w2_ref, b2_ref, g2_ref, be2_ref,
                    out_ref, y_scr, acc_scr):
    f = pl.program_id(2)

    @pl.when(f == 0)
    def _():
        x = x_ref[...].astype(jnp.float32)                     # (TS, E) residual path
        attn = jnp.dot(ctx_ref[...], wo_ref[...],
                       preferred_element_type=jnp.float32) + bo_ref[...]
        y_scr[...] = _layernorm(x + attn, g1_ref[...], be1_ref[...])
        acc_scr[...] = jnp.zeros(acc_scr.shape, dtype=acc_scr.dtype)

    # Stream the FFN hidden dimension: one (E, TF) / (TF, E) weight chunk per step,
    # so neither w1/w2 nor the (TS, F) hidden activation is ever fully resident.
    h1 = jnp.dot(y_scr[...].astype(jnp.bfloat16), w1_ref[...],
                 preferred_element_type=jnp.float32) + b1_ref[...]
    h1 = jnp.maximum(h1, 0.0)
    acc_scr[...] += jnp.dot(h1.astype(jnp.bfloat16), w2_ref[...],
                            preferred_element_type=jnp.float32)

    @pl.when(f == pl.num_programs(2) - 1)
    def _():
        ffn = acc_scr[...] + b2_ref[...]
        out_ref[...] = _layernorm(y_scr[...] + ffn,
                                  g2_ref[...], be2_ref[...]).astype(out_ref.dtype)


def _attn_out_ffn(ctx, x, p, ts, tf):
    B, S, E = x.shape
    F = p["w1"].shape[1]

    def act_spec():
        return pl.BlockSpec((None, ts, E), lambda b, s, f: (b, s, 0))

    def const_spec(shape):
        return pl.BlockSpec(shape, lambda b, s, f: (0, 0))

    w1_spec = pl.BlockSpec((E, tf), lambda b, s, f: (0, f))
    b1_spec = pl.BlockSpec((1, tf), lambda b, s, f: (0, f))
    w2_spec = pl.BlockSpec((tf, E), lambda b, s, f: (f, 0))

    return pl.pallas_call(
        _out_ffn_kernel,
        out_shape=jax.ShapeDtypeStruct((B, S, E), x.dtype),
        grid_spec=pltpu.PrefetchScalarGridSpec(
            num_scalar_prefetch=0,
            grid=(B, S // ts, F // tf),
            in_specs=[act_spec(), act_spec(),
                      const_spec(p["wo"].shape), const_spec(p["bo"].shape),
                      const_spec(p["g1"].shape), const_spec(p["be1"].shape),
                      w1_spec, b1_spec, w2_spec,
                      const_spec(p["b2"].shape),
                      const_spec(p["g2"].shape), const_spec(p["be2"].shape)],
            out_specs=pl.BlockSpec((None, ts, E), lambda b, s, f: (b, s, 0)),
            scratch_shapes=[pltpu.VMEM((ts, E), jnp.float32),   # y = LN1(x + attn)
                            pltpu.VMEM((ts, E), jnp.float32)],  # FFN accumulator
        ),
        compiler_params=pltpu.CompilerParams(
            dimension_semantics=("parallel", "parallel", "arbitrary"),
            vmem_limit_bytes=_vmem_limit_bytes(),
        ),
    )(ctx, x, p["wo"], p["bo"], p["g1"], p["be1"],
      p["w1"], p["b1"], p["w2"], p["b2"], p["g2"], p["be2"])


# ---------------------------------------------------------------------------
# Parameter preparation & top-level forward
# ---------------------------------------------------------------------------

_MXU_WEIGHTS = ("wq", "wk", "wv", "wo", "w1", "w2")


def prepare_params(params, num_heads):
    """One-time host-side transform: fold softmax scale into Wq/bq, cast matmul
    weights to bf16 (biases / layernorm params stay f32). Call once, reuse."""
    E = params["wq"].shape[0]
    head_dim = E // num_heads
    scale = 1.0 / math.sqrt(head_dim)
    p = dict(params)
    p["wq"] = params["wq"] * scale
    p["bq"] = params["bq"] * scale
    for name in _MXU_WEIGHTS:
        p[name] = p[name].astype(jnp.bfloat16)
    return p


@functools.partial(jax.jit, static_argnames=("num_heads",))
def encoder_layer(x, params, *, num_heads):
    """Post-LN transformer encoder layer forward pass (eval mode)."""
    B, S, E = x.shape
    assert E % num_heads == 0
    head_dim = E // num_heads
    F = params["w1"].shape[1]

    # Tile selection (full extent for tiny shapes; 256-seq / 512-F chunks otherwise).
    ts = _pick_tile(S, 256, 8)      # sequence tile for projections / out-proj+FFN
    tq = _pick_tile(S, 256, 8)      # flash-attention query tile
    tk = _pick_tile(S, 256, 8)      # flash-attention kv tile
    tf = _pick_tile(F, 512, 128)    # FFN hidden-dim streaming chunk

    # 1) fused QKV projection (scale already folded into wq/bq).
    q, k, v = _qkv_proj(x, params, ts)

    # 2) flash attention over (batch*heads); head split/merge is wrapper-side
    #    layout plumbing handled by XLA (keeps per-head last dim lane-dense).
    def to_heads(t):
        return (t.reshape(B, S, num_heads, head_dim)
                 .transpose(0, 2, 1, 3)
                 .reshape(B * num_heads, S, head_dim))

    o = _flash_attention(to_heads(q), to_heads(k), to_heads(v), tq, tk)
    ctx = (o.reshape(B, num_heads, S, head_dim)
            .transpose(0, 2, 1, 3)
            .reshape(B, S, E))

    # 3) output projection + residual/LN1 + F-streamed FFN + residual/LN2.
    return _attn_out_ffn(ctx, x, params, ts, tf)


def init_params(key, embedding_dim, num_heads, ffn_dim):
    E, F = embedding_dim, ffn_dim
    ks = jax.random.split(key, 8)
    scale = 0.05
    return {
        # attention in-proj (stored transposed: (in, out))
        "wq": scale * jax.random.normal(ks[0], (E, E), jnp.float32),
        "wk": scale * jax.random.normal(ks[1], (E, E), jnp.float32),
        "wv": scale * jax.random.normal(ks[2], (E, E), jnp.float32),
        "bq": jnp.zeros((1, E), jnp.float32),
        "bk": jnp.zeros((1, E), jnp.float32),
        "bv": jnp.zeros((1, E), jnp.float32),
        # attention out-proj
        "wo": scale * jax.random.normal(ks[3], (E, E), jnp.float32),
        "bo": 0.01 * jnp.ones((1, E), jnp.float32),
        # FFN
        "w1": scale * jax.random.normal(ks[4], (E, F), jnp.float32),
        "b1": 0.01 * jnp.ones((1, F), jnp.float32),
        "w2": scale * jax.random.normal(ks[5], (F, E), jnp.float32),
        "b2": 0.01 * jnp.ones((1, E), jnp.float32),
        # LayerNorms
        "g1": jnp.ones((1, E), jnp.float32),
        "be1": jnp.zeros((1, E), jnp.float32),
        "g2": jnp.ones((1, E), jnp.float32),
        "be2": jnp.zeros((1, E), jnp.float32),
    }


if __name__ == "__main__":
    # NOTE: demo shapes are tiny (lane under-utilized by construction); tune /
    # benchmark with production shapes (E, head_dim multiples of 128/64, S >= 1024).
    B, S, E, H, F = 2, 8, 32, 4, 64   # batch, seq, embed_dim, heads, ffn_dim
    key = jax.random.PRNGKey(0)
    kx, kp = jax.random.split(key)
    x = jax.random.normal(kx, (B, S, E), jnp.float32)
    params = init_params(kp, E, H, F)
    prepared = prepare_params(params, num_heads=H)   # one-time bf16 cast / scale fold

    out = encoder_layer(x, prepared, num_heads=H)
    jax.block_until_ready(out)
    assert out.shape == (B, S, E) and out.dtype == jnp.float32
    print("KERNEL_OK")
</pallas_src>

<mosaic_0001>
module attributes {stable_mosaic.version = 11 : i64} {
  func.func @_qkv_kernel(%arg0: i32, %arg1: i32, %arg2: memref<1x8x32xf32, #tpu.memory_space<vmem>>, %arg3: memref<32x32xbf16, #tpu.memory_space<vmem>>, %arg4: memref<32x32xbf16, #tpu.memory_space<vmem>>, %arg5: memref<32x32xbf16, #tpu.memory_space<vmem>>, %arg6: memref<1x32xf32, #tpu.memory_space<vmem>>, %arg7: memref<1x32xf32, #tpu.memory_space<vmem>>, %arg8: memref<1x32xf32, #tpu.memory_space<vmem>>, %arg9: memref<1x8x32xbf16, #tpu.memory_space<vmem>>, %arg10: memref<1x8x32xbf16, #tpu.memory_space<vmem>>, %arg11: memref<1x8x32xbf16, #tpu.memory_space<vmem>>) attributes {dimension_semantics = [#tpu.dimension_semantics<parallel>, #tpu.dimension_semantics<parallel>], iteration_bounds = array<i64: 2, 1>, scalar_prefetch = 0 : i64, scratch_operands = 0 : i64, tpu.core_type = #tpu.core_type<tc>, window_params = [{transform_indices = @transform_0, window_bounds = array<i64: 1, 8, 32>}, {pipeline_mode = #tpu.pipeline_mode<synchronous>, transform_indices = @transform_1, window_bounds = array<i64: 32, 32>}, {pipeline_mode = #tpu.pipeline_mode<synchronous>, transform_indices = @transform_2, window_bounds = array<i64: 32, 32>}, {pipeline_mode = #tpu.pipeline_mode<synchronous>, transform_indices = @transform_3, window_bounds = array<i64: 32, 32>}, {pipeline_mode = #tpu.pipeline_mode<synchronous>, transform_indices = @transform_4, window_bounds = array<i64: 1, 32>}, {pipeline_mode = #tpu.pipeline_mode<synchronous>, transform_indices = @transform_5, window_bounds = array<i64: 1, 32>}, {pipeline_mode = #tpu.pipeline_mode<synchronous>, transform_indices = @transform_6, window_bounds = array<i64: 1, 32>}, {transform_indices = @transform_7, window_bounds = array<i64: 1, 8, 32>}, {transform_indices = @transform_8, window_bounds = array<i64: 1, 8, 32>}, {transform_indices = @transform_9, window_bounds = array<i64: 1, 8, 32>}]} {
    %c0 = arith.constant 0 : index
    %c0_0 = arith.constant 0 : index
    %c0_1 = arith.constant 0 : index
    %0 = vector.load %arg2[%c0, %c0_0, %c0_1] : memref<1x8x32xf32, #tpu.memory_space<vmem>>, vector<1x8x32xf32>
    %1 = vector.shape_cast %0 : vector<1x8x32xf32> to vector<8x32xf32>
    %2 = arith.truncf %1 : vector<8x32xf32> to vector<8x32xbf16>
    %c0_2 = arith.constant 0 : index
    %c0_3 = arith.constant 0 : index
    %3 = vector.load %arg3[%c0_2, %c0_3] : memref<32x32xbf16, #tpu.memory_space<vmem>>, vector<32x32xbf16>
    %cst = arith.constant dense<0.000000e+00> : vector<8x32xf32>
    %4 = tpu.matmul %2, %3, %cst {dimension_numbers = #tpu.dot_dimension_numbers<[1], [0], [0], [1], [0, 0, 1, 1], [], []>} : vector<8x32xbf16>, vector<32x32xbf16>, vector<8x32xf32> -> vector<8x32xf32>
    %c0_4 = arith.constant 0 : index
    %c0_5 = arith.constant 0 : index
    %5 = vector.load %arg6[%c0_4, %c0_5] : memref<1x32xf32, #tpu.memory_space<vmem>>, vector<1x32xf32>
    %6 = vector.broadcast %5 : vector<1x32xf32> to vector<8x32xf32>
    %7 = arith.addf %4, %6 : vector<8x32xf32>
    %c0_6 = arith.constant 0 : index
    %c0_7 = arith.constant 0 : index
    %8 = vector.load %arg4[%c0_6, %c0_7] : memref<32x32xbf16, #tpu.memory_space<vmem>>, vector<32x32xbf16>
    %cst_8 = arith.constant dense<0.000000e+00> : vector<8x32xf32>
    %9 = tpu.matmul %2, %8, %cst_8 {dimension_numbers = #tpu.dot_dimension_numbers<[1], [0], [0], [1], [0, 0, 1, 1], [], []>} : vector<8x32xbf16>, vector<32x32xbf16>, vector<8x32xf32> -> vector<8x32xf32>
    %c0_9 = arith.constant 0 : index
    %c0_10 = arith.constant 0 : index
    %10 = vector.load %arg7[%c0_9, %c0_10] : memref<1x32xf32, #tpu.memory_space<vmem>>, vector<1x32xf32>
    %11 = vector.broadcast %10 : vector<1x32xf32> to vector<8x32xf32>
    %12 = arith.addf %9, %11 : vector<8x32xf32>
    %c0_11 = arith.constant 0 : index
    %c0_12 = arith.constant 0 : index
    %13 = vector.load %arg5[%c0_11, %c0_12] : memref<32x32xbf16, #tpu.memory_space<vmem>>, vector<32x32xbf16>
    %cst_13 = arith.constant dense<0.000000e+00> : vector<8x32xf32>
    %14 = tpu.matmul %2, %13, %cst_13 {dimension_numbers = #tpu.dot_dimension_numbers<[1], [0], [0], [1], [0, 0, 1, 1], [], []>} : vector<8x32xbf16>, vector<32x32xbf16>, vector<8x32xf32> -> vector<8x32xf32>
    %c0_14 = arith.constant 0 : index
    %c0_15 = arith.constant 0 : index
    %15 = vector.load %arg8[%c0_14, %c0_15] : memref<1x32xf32, #tpu.memory_space<vmem>>, vector<1x32xf32>
    %16 = vector.broadcast %15 : vector<1x32xf32> to vector<8x32xf32>
    %17 = arith.addf %14, %16 : vector<8x32xf32>
    %18 = arith.truncf %7 : vector<8x32xf32> to vector<8x32xbf16>
    %c0_16 = arith.constant 0 : index
    %c0_17 = arith.constant 0 : index
    %c0_18 = arith.constant 0 : index
    %19 = vector.load %arg9[%c0_16, %c0_17, %c0_18] : memref<1x8x32xbf16, #tpu.memory_space<vmem>>, vector<1x8x32xbf16>
    %20 = vector.shape_cast %19 : vector<1x8x32xbf16> to vector<8x32xbf16>
    %21 = vector.shape_cast %18 : vector<8x32xbf16> to vector<1x8x32xbf16>
    tpu.vector_store %arg9[%c0_16, %c0_17, %c0_18], %21 {strides = array<i32>} : memref<1x8x32xbf16, #tpu.memory_space<vmem>>, vector<1x8x32xbf16>,
    %22 = arith.truncf %12 : vector<8x32xf32> to vector<8x32xbf16>
    %c0_19 = arith.constant 0 : index
    %c0_20 = arith.constant 0 : index
    %c0_21 = arith.constant 0 : index
    %23 = vector.load %arg10[%c0_19, %c0_20, %c0_21] : memref<1x8x32xbf16, #tpu.memory_space<vmem>>, vector<1x8x32xbf16>
    %24 = vector.shape_cast %23 : vector<1x8x32xbf16> to vector<8x32xbf16>
    %25 = vector.shape_cast %22 : vector<8x32xbf16> to vector<1x8x32xbf16>
    tpu.vector_store %arg10[%c0_19, %c0_20, %c0_21], %25 {strides = array<i32>} : memref<1x8x32xbf16, #tpu.memory_space<vmem>>, vector<1x8x32xbf16>,
    %26 = arith.truncf %17 : vector<8x32xf32> to vector<8x32xbf16>
    %c0_22 = arith.constant 0 : index
    %c0_23 = arith.constant 0 : index
    %c0_24 = arith.constant 0 : index
    %27 = vector.load %arg11[%c0_22, %c0_23, %c0_24] : memref<1x8x32xbf16, #tpu.memory_space<vmem>>, vector<1x8x32xbf16>
    %28 = vector.shape_cast %27 : vector<1x8x32xbf16> to vector<8x32xbf16>
    %29 = vector.shape_cast %26 : vector<8x32xbf16> to vector<1x8x32xbf16>
    tpu.vector_store %arg11[%c0_22, %c0_23, %c0_24], %29 {strides = array<i32>} : memref<1x8x32xbf16, #tpu.memory_space<vmem>>, vector<1x8x32xbf16>,
    return
  }
  func.func @transform_0(%arg0: i32, %arg1: i32) -> (i32, i32, i32) {
    %c0_i32 = arith.constant 0 : i32
    %c0_i32_0 = arith.constant 0 : i32
    return %arg0, %arg1, %c0_i32 : i32, i32, i32
  }
  func.func @transform_1(%arg0: i32, %arg1: i32) -> (i32, i32) {
    %c0_i32 = arith.constant 0 : i32
    %c0_i32_0 = arith.constant 0 : i32
    %c0_i32_1 = arith.constant 0 : i32
    return %c0_i32, %c0_i32_0 : i32, i32
  }
  func.func @transform_2(%arg0: i32, %arg1: i32) -> (i32, i32) {
    %c0_i32 = arith.constant 0 : i32
    %c0_i32_0 = arith.constant 0 : i32
    %c0_i32_1 = arith.constant 0 : i32
    return %c0_i32, %c0_i32_0 : i32, i32
  }
  func.func @transform_3(%arg0: i32, %arg1: i32) -> (i32, i32) {
    %c0_i32 = arith.constant 0 : i32
    %c0_i32_0 = arith.constant 0 : i32
    %c0_i32_1 = arith.constant 0 : i32
    return %c0_i32, %c0_i32_0 : i32, i32
  }
  func.func @transform_4(%arg0: i32, %arg1: i32) -> (i32, i32) {
    %c0_i32 = arith.constant 0 : i32
    %c0_i32_0 = arith.constant 0 : i32
    %c0_i32_1 = arith.constant 0 : i32
    return %c0_i32, %c0_i32_0 : i32, i32
  }
  func.func @transform_5(%arg0: i32, %arg1: i32) -> (i32, i32) {
    %c0_i32 = arith.constant 0 : i32
    %c0_i32_0 = arith.constant 0 : i32
    %c0_i32_1 = arith.constant 0 : i32
    return %c0_i32, %c0_i32_0 : i32, i32
  }
  func.func @transform_6(%arg0: i32, %arg1: i32) -> (i32, i32) {
    %c0_i32 = arith.constant 0 : i32
    %c0_i32_0 = arith.constant 0 : i32
    %c0_i32_1 = arith.constant 0 : i32
    return %c0_i32, %c0_i32_0 : i32, i32
  }
  func.func @transform_7(%arg0: i32, %arg1: i32) -> (i32, i32, i32) {
    %c0_i32 = arith.constant 0 : i32
    %c0_i32_0 = arith.constant 0 : i32
    return %arg0, %arg1, %c0_i32 : i32, i32, i32
  }
  func.func @transform_8(%arg0: i32, %arg1: i32) -> (i32, i32, i32) {
    %c0_i32 = arith.constant 0 : i32
    %c0_i32_0 = arith.constant 0 : i32
    return %arg0, %arg1, %c0_i32 : i32, i32, i32
  }
  func.func @transform_9(%arg0: i32, %arg1: i32) -> (i32, i32, i32) {
    %c0_i32 = arith.constant 0 : i32
    %c0_i32_0 = arith.constant 0 : i32
    return %arg0, %arg1, %c0_i32 : i32, i32, i32
  }
}

module attributes {stable_mosaic.version = 11 : i64} {
  func.func @_flash_kernel(%arg0: i32, %arg1: i32, %arg2: i32, %arg3: memref<1x8x8xbf16, #tpu.memory_space<vmem>>, %arg4: memref<1x8x8xbf16, #tpu.memory_space<vmem>>, %arg5: memref<1x8x8xbf16, #tpu.memory_space<vmem>>, %arg6: memref<1x8x8xbf16, #tpu.memory_space<vmem>>, %arg7: memref<8x1xf32, #tpu.memory_space<vmem>>, %arg8: memref<8x1xf32, #tpu.memory_space<vmem>>, %arg9: memref<8x8xf32, #tpu.memory_space<vmem>>) attributes {dimension_semantics = [#tpu.dimension_semantics<parallel>, #tpu.dimension_semantics<parallel>, #tpu.dimension_semantics<arbitrary>], iteration_bounds = array<i64: 8, 1, 1>, scalar_prefetch = 0 : i64, scratch_operands = 3 : i64, tpu.core_type = #tpu.core_type<tc>, window_params = [{transform_indices = @transform_0, window_bounds = array<i64: 1, 8, 8>}, {transform_indices = @transform_1, window_bounds = array<i64: 1, 8, 8>}, {transform_indices = @transform_2, window_bounds = array<i64: 1, 8, 8>}, {transform_indices = @transform_3, window_bounds = array<i64: 1, 8, 8>}]} {
    %c0_i32 = arith.constant 0 : i32
    %0 = arith.cmpi eq, %arg2, %c0_i32 : i32
    %1 = arith.extui %0 : i1 to i32
    %c0_i32_0 = arith.constant 0 : i32
    %2 = arith.cmpi ne, %1, %c0_i32_0 : i32
    scf.if %2 {
      %cst_26 = arith.constant 0xFF800000 : f32
      %36 = vector.broadcast %cst_26 : f32 to vector<8x1xf32>
      %c0_27 = arith.constant 0 : index
      %c0_28 = arith.constant 0 : index
      %37 = vector.load %arg7[%c0_27, %c0_28] : memref<8x1xf32, #tpu.memory_space<vmem>>, vector<8x1xf32>
      tpu.vector_store %arg7[%c0_27, %c0_28], %36 {strides = array<i32>} : memref<8x1xf32, #tpu.memory_space<vmem>>, vector<8x1xf32>,
      %cst_29 = arith.constant 0.000000e+00 : f32
      %38 = vector.broadcast %cst_29 : f32 to vector<8x1xf32>
      %c0_30 = arith.constant 0 : index
      %c0_31 = arith.constant 0 : index
      %39 = vector.load %arg8[%c0_30, %c0_31] : memref<8x1xf32, #tpu.memory_space<vmem>>, vector<8x1xf32>
      tpu.vector_store %arg8[%c0_30, %c0_31], %38 {strides = array<i32>} : memref<8x1xf32, #tpu.memory_space<vmem>>, vector<8x1xf32>,
      %cst_32 = arith.constant 0.000000e+00 : f32
      %40 = vector.broadcast %cst_32 : f32 to vector<8x8xf32>
      %c0_33 = arith.constant 0 : index
      %c0_34 = arith.constant 0 : index
      %41 = vector.load %arg9[%c0_33, %c0_34] : memref<8x8xf32, #tpu.memory_space<vmem>>, vector<8x8xf32>
      tpu.vector_store %arg9[%c0_33, %c0_34], %40 {strides = array<i32>} : memref<8x8xf32, #tpu.memory_space<vmem>>, vector<8x8xf32>,
    } else {
    }
    %c0 = arith.constant 0 : index
    %c0_1 = arith.constant 0 : index
    %c0_2 = arith.constant 0 : index
    %3 = vector.load %arg3[%c0, %c0_1, %c0_2] : memref<1x8x8xbf16, #tpu.memory_space<vmem>>, vector<1x8x8xbf16>
    %4 = vector.shape_cast %3 : vector<1x8x8xbf16> to vector<8x8xbf16>
    %c0_3 = arith.constant 0 : index
    %c0_4 = arith.constant 0 : index
    %c0_5 = arith.constant 0 : index
    %5 = vector.load %arg4[%c0_3, %c0_4, %c0_5] : memref<1x8x8xbf16, #tpu.memory_space<vmem>>, vector<1x8x8xbf16>
    %6 = vector.shape_cast %5 : vector<1x8x8xbf16> to vector<8x8xbf16>
    %cst = arith.constant dense<0.000000e+00> : vector<8x8xf32>
    %7 = tpu.matmul %4, %6, %cst {dimension_numbers = #tpu.dot_dimension_numbers<[1], [1], [0], [0], [0, 0, 1, 0], [], []>} : vector<8x8xbf16>, vector<8x8xbf16>, vector<8x8xf32> -> vector<8x8xf32>
    %c0_6 = arith.constant 0 : index
    %c0_7 = arith.constant 0 : index
    %8 = vector.load %arg7[%c0_6, %c0_7] : memref<8x1xf32, #tpu.memory_space<vmem>>, vector<8x1xf32>
    %cst_8 = arith.constant dense<0xFF800000> : vector<8xf32>
    %9 = vector.multi_reduction <maximumf>, %7, %cst_8 [1] : vector<8x8xf32> to vector<8xf32>
    %10 = vector.shape_cast %9 : vector<8xf32> to vector<8x1xf32>
    %11 = arith.maximumf %8, %10 : vector<8x1xf32>
    %12 = arith.subf %8, %11 : vector<8x1xf32>
    %13 = math.exp %12 : vector<8x1xf32>
    %14 = vector.broadcast %11 : vector<8x1xf32> to vector<8x8xf32>
    %15 = arith.subf %7, %14 : vector<8x8xf32>
    %16 = math.exp %15 : vector<8x8xf32>
    %c0_9 = arith.constant 0 : index
    %c0_10 = arith.constant 0 : index
    %17 = vector.load %arg8[%c0_9, %c0_10] : memref<8x1xf32, #tpu.memory_space<vmem>>, vector<8x1xf32>
    %18 = arith.mulf %13, %17 : vector<8x1xf32>
    %cst_11 = arith.constant dense<0.000000e+00> : vector<8xf32>
    %19 = vector.multi_reduction <add>, %16, %cst_11 [1] : vector<8x8xf32> to vector<8xf32>
    %20 = vector.shape_cast %19 : vector<8xf32> to vector<8x1xf32>
    %21 = arith.addf %18, %20 : vector<8x1xf32>
    %c0_12 = arith.constant 0 : index
    %c0_13 = arith.constant 0 : index
    %22 = vector.load %arg8[%c0_12, %c0_13] : memref<8x1xf32, #tpu.memory_space<vmem>>, vector<8x1xf32>
    tpu.vector_store %arg8[%c0_12, %c0_13], %21 {strides = array<i32>} : memref<8x1xf32, #tpu.memory_space<vmem>>, vector<8x1xf32>,
    %c0_14 = arith.constant 0 : index
    %c0_15 = arith.constant 0 : index
    %23 = vector.load %arg9[%c0_14, %c0_15] : memref<8x8xf32, #tpu.memory_space<vmem>>, vector<8x8xf32>
    %24 = vector.broadcast %13 : vector<8x1xf32> to vector<8x8xf32>
    %25 = arith.mulf %24, %23 : vector<8x8xf32>
    %26 = arith.truncf %16 : vector<8x8xf32> to vector<8x8xbf16>
    %c0_16 = arith.constant 0 : index
    %c0_17 = arith.constant 0 : index
    %c0_18 = arith.constant 0 : index
    %27 = vector.load %arg5[%c0_16, %c0_17, %c0_18] : memref<1x8x8xbf16, #tpu.memory_space<vmem>>, vector<1x8x8xbf16>
    %28 = vector.shape_cast %27 : vector<1x8x8xbf16> to vector<8x8xbf16>
    %cst_19 = arith.constant dense<0.000000e+00> : vector<8x8xf32>
    %29 = tpu.matmul %26, %28, %cst_19 {dimension_numbers = #tpu.dot_dimension_numbers<[1], [0], [0], [1], [0, 0, 1, 1], [], []>} : vector<8x8xbf16>, vector<8x8xbf16>, vector<8x8xf32> -> vector<8x8xf32>
    %30 = arith.addf %25, %29 : vector<8x8xf32>
    %c0_20 = arith.constant 0 : index
    %c0_21 = arith.constant 0 : index
    %31 = vector.load %arg9[%c0_20, %c0_21] : memref<8x8xf32, #tpu.memory_space<vmem>>, vector<8x8xf32>
    tpu.vector_store %arg9[%c0_20, %c0_21], %30 {strides = array<i32>} : memref<8x8xf32, #tpu.memory_space<vmem>>, vector<8x8xf32>,
    %c0_22 = arith.constant 0 : index
    %c0_23 = arith.constant 0 : index
    %32 = vector.load %arg7[%c0_22, %c0_23] : memref<8x1xf32, #tpu.memory_space<vmem>>, vector<8x1xf32>
    tpu.vector_store %arg7[%c0_22, %c0_23], %11 {strides = array<i32>} : memref<8x1xf32, #tpu.memory_space<vmem>>, vector<8x1xf32>,
    %c0_i32_24 = arith.constant 0 : i32
    %33 = arith.cmpi eq, %arg2, %c0_i32_24 : i32
    %34 = arith.extui %33 : i1 to i32
    %c0_i32_25 = arith.constant 0 : i32
    %35 = arith.cmpi ne, %34, %c0_i32_25 : i32
    scf.if %35 {
      %c0_26 = arith.constant 0 : index
      %c0_27 = arith.constant 0 : index
      %36 = vector.load %arg9[%c0_26, %c0_27] : memref<8x8xf32, #tpu.memory_space<vmem>>, vector<8x8xf32>
      %c0_28 = arith.constant 0 : index
      %c0_29 = arith.constant 0 : index
      %37 = vector.load %arg8[%c0_28, %c0_29] : memref<8x1xf32, #tpu.memory_space<vmem>>, vector<8x1xf32>
      %38 = tpu.reciprocal %37 {approx = true} : vector<8x1xf32> -> vector<8x1xf32>
      %39 = vector.broadcast %38 : vector<8x1xf32> to vector<8x8xf32>
      %40 = arith.mulf %36, %39 : vector<8x8xf32>
      %41 = arith.truncf %40 : vector<8x8xf32> to vector<8x8xbf16>
      %c0_30 = arith.constant 0 : index
      %c0_31 = arith.constant 0 : index
      %c0_32 = arith.constant 0 : index
      %42 = vector.load %arg6[%c0_30, %c0_31, %c0_32] : memref<1x8x8xbf16, #tpu.memory_space<vmem>>, vector<1x8x8xbf16>
      %43 = vector.shape_cast %42 : vector<1x8x8xbf16> to vector<8x8xbf16>
      %44 = vector.shape_cast %41 : vector<8x8xbf16> to vector<1x8x8xbf16>
      tpu.vector_store %arg6[%c0_30, %c0_31, %c0_32], %44 {strides = array<i32>} : memref<1x8x8xbf16, #tpu.memory_space<vmem>>, vector<1x8x8xbf16>,
    } else {
    }
    return
  }
  func.func @transform_0(%arg0: i32, %arg1: i32, %arg2: i32) -> (i32, i32, i32) {
    %c0_i32 = arith.constant 0 : i32
    %c0_i32_0 = arith.constant 0 : i32
    return %arg0, %arg1, %c0_i32 : i32, i32, i32
  }
  func.func @transform_1(%arg0: i32, %arg1: i32, %arg2: i32) -> (i32, i32, i32) {
    %c0_i32 = arith.constant 0 : i32
    %c0_i32_0 = arith.constant 0 : i32
    return %arg0, %arg2, %c0_i32 : i32, i32, i32
  }
  func.func @transform_2(%arg0: i32, %arg1: i32, %arg2: i32) -> (i32, i32, i32) {
    %c0_i32 = arith.constant 0 : i32
    %c0_i32_0 = arith.constant 0 : i32
    return %arg0, %arg2, %c0_i32 : i32, i32, i32
  }
  func.func @transform_3(%arg0: i32, %arg1: i32, %arg2: i32) -> (i32, i32, i32) {
    %c0_i32 = arith.constant 0 : i32
    %c0_i32_0 = arith.constant 0 : i32
    return %arg0, %arg1, %c0_i32 : i32, i32, i32
  }
}

module attributes {stable_mosaic.version = 11 : i64} {
  func.func @_out_ffn_kernel(%arg0: i32, %arg1: i32, %arg2: i32, %arg3: memref<1x8x32xbf16, #tpu.memory_space<vmem>>, %arg4: memref<1x8x32xf32, #tpu.memory_space<vmem>>, %arg5: memref<32x32xbf16, #tpu.memory_space<vmem>>, %arg6: memref<1x32xf32, #tpu.memory_space<vmem>>, %arg7: memref<1x32xf32, #tpu.memory_space<vmem>>, %arg8: memref<1x32xf32, #tpu.memory_space<vmem>>, %arg9: memref<32x64xbf16, #tpu.memory_space<vmem>>, %arg10: memref<1x64xf32, #tpu.memory_space<vmem>>, %arg11: memref<64x32xbf16, #tpu.memory_space<vmem>>, %arg12: memref<1x32xf32, #tpu.memory_space<vmem>>, %arg13: memref<1x32xf32, #tpu.memory_space<vmem>>, %arg14: memref<1x32xf32, #tpu.memory_space<vmem>>, %arg15: memref<1x8x32xf32, #tpu.memory_space<vmem>>, %arg16: memref<8x32xf32, #tpu.memory_space<vmem>>, %arg17: memref<8x32xf32, #tpu.memory_space<vmem>>) attributes {dimension_semantics = [#tpu.dimension_semantics<parallel>, #tpu.dimension_semantics<parallel>, #tpu.dimension_semantics<arbitrary>], iteration_bounds = array<i64: 2, 1, 1>, scalar_prefetch = 0 : i64, scratch_operands = 2 : i64, tpu.core_type = #tpu.core_type<tc>, window_params = [{transform_indices = @transform_0, window_bounds = array<i64: 1, 8, 32>}, {transform_indices = @transform_1, window_bounds = array<i64: 1, 8, 32>}, {pipeline_mode = #tpu.pipeline_mode<synchronous>, transform_indices = @transform_2, window_bounds = array<i64: 32, 32>}, {pipeline_mode = #tpu.pipeline_mode<synchronous>, transform_indices = @transform_3, window_bounds = array<i64: 1, 32>}, {pipeline_mode = #tpu.pipeline_mode<synchronous>, transform_indices = @transform_4, window_bounds = array<i64: 1, 32>}, {pipeline_mode = #tpu.pipeline_mode<synchronous>, transform_indices = @transform_5, window_bounds = array<i64: 1, 32>}, {transform_indices = @transform_6, window_bounds = array<i64: 32, 64>}, {transform_indices = @transform_7, window_bounds = array<i64: 1, 64>}, {transform_indices = @transform_8, window_bounds = array<i64: 64, 32>}, {pipeline_mode = #tpu.pipeline_mode<synchronous>, transform_indices = @transform_9, window_bounds = array<i64: 1, 32>}, {pipeline_mode = #tpu.pipeline_mode<synchronous>, transform_indices = @transform_10, window_bounds = array<i64: 1, 32>}, {pipeline_mode = #tpu.pipeline_mode<synchronous>, transform_indices = @transform_11, window_bounds = array<i64: 1, 32>}, {transform_indices = @transform_12, window_bounds = array<i64: 1, 8, 32>}]} {
    %c0_i32 = arith.constant 0 : i32
    %0 = arith.cmpi eq, %arg2, %c0_i32 : i32
    %1 = arith.extui %0 : i1 to i32
    %c0_i32_0 = arith.constant 0 : i32
    %2 = arith.cmpi ne, %1, %c0_i32_0 : i32
    scf.if %2 {
      %c0_16 = arith.constant 0 : index
      %c0_17 = arith.constant 0 : index
      %c0_18 = arith.constant 0 : index
      %21 = vector.load %arg4[%c0_16, %c0_17, %c0_18] : memref<1x8x32xf32, #tpu.memory_space<vmem>>, vector<1x8x32xf32>
      %22 = vector.shape_cast %21 : vector<1x8x32xf32> to vector<8x32xf32>
      %c0_19 = arith.constant 0 : index
      %c0_20 = arith.constant 0 : index
      %c0_21 = arith.constant 0 : index
      %23 = vector.load %arg3[%c0_19, %c0_20, %c0_21] : memref<1x8x32xbf16, #tpu.memory_space<vmem>>, vector<1x8x32xbf16>
      %24 = vector.shape_cast %23 : vector<1x8x32xbf16> to vector<8x32xbf16>
      %c0_22 = arith.constant 0 : index
      %c0_23 = arith.constant 0 : index
      %25 = vector.load %arg5[%c0_22, %c0_23] : memref<32x32xbf16, #tpu.memory_space<vmem>>, vector<32x32xbf16>
      %cst_24 = arith.constant dense<0.000000e+00> : vector<8x32xf32>
      %26 = tpu.matmul %24, %25, %cst_24 {dimension_numbers = #tpu.dot_dimension_numbers<[1], [0], [0], [1], [0, 0, 1, 1], [], []>} : vector<8x32xbf16>, vector<32x32xbf16>, vector<8x32xf32> -> vector<8x32xf32>
      %c0_25 = arith.constant 0 : index
      %c0_26 = arith.constant 0 : index
      %27 = vector.load %arg6[%c0_25, %c0_26] : memref<1x32xf32, #tpu.memory_space<vmem>>, vector<1x32xf32>
      %28 = vector.broadcast %27 : vector<1x32xf32> to vector<8x32xf32>
      %29 = arith.addf %26, %28 : vector<8x32xf32>
      %30 = arith.addf %22, %29 : vector<8x32xf32>
      %c0_27 = arith.constant 0 : index
      %c0_28 = arith.constant 0 : index
      %31 = vector.load %arg7[%c0_27, %c0_28] : memref<1x32xf32, #tpu.memory_space<vmem>>, vector<1x32xf32>
      %c0_29 = arith.constant 0 : index
      %c0_30 = arith.constant 0 : index
      %32 = vector.load %arg8[%c0_29, %c0_30] : memref<1x32xf32, #tpu.memory_space<vmem>>, vector<1x32xf32>
      %cst_31 = arith.constant dense<0.000000e+00> : vector<8xf32>
      %33 = vector.multi_reduction <add>, %30, %cst_31 [1] : vector<8x32xf32> to vector<8xf32>
      %34 = vector.shape_cast %33 : vector<8xf32> to vector<8x1xf32>
      %cst_32 = arith.constant 3.200000e+01 : f32
      %35 = vector.broadcast %cst_32 : f32 to vector<8x1xf32>
      %36 = arith.divf %34, %35 : vector<8x1xf32>
      %37 = vector.broadcast %36 : vector<8x1xf32> to vector<8x32xf32>
      %38 = arith.subf %30, %37 : vector<8x32xf32>
      %39 = arith.mulf %38, %38 : vector<8x32xf32>
      %cst_33 = arith.constant dense<0.000000e+00> : vector<8xf32>
      %40 = vector.multi_reduction <add>, %39, %cst_33 [1] : vector<8x32xf32> to vector<8xf32>
      %41 = vector.shape_cast %40 : vector<8xf32> to vector<8x1xf32>
      %cst_34 = arith.constant 3.200000e+01 : f32
      %42 = vector.broadcast %cst_34 : f32 to vector<8x1xf32>
      %43 = arith.divf %41, %42 : vector<8x1xf32>
      %44 = vector.broadcast %36 : vector<8x1xf32> to vector<8x32xf32>
      %45 = arith.subf %30, %44 : vector<8x32xf32>
      %cst_35 = arith.constant 9.99999974E-6 : f32
      %46 = vector.broadcast %cst_35 : f32 to vector<8x1xf32>
      %47 = arith.addf %43, %46 : vector<8x1xf32>
      %48 = math.rsqrt %47 : vector<8x1xf32>
      %49 = vector.broadcast %48 : vector<8x1xf32> to vector<8x32xf32>
      %50 = arith.mulf %45, %49 : vector<8x32xf32>
      %51 = vector.broadcast %31 : vector<1x32xf32> to vector<8x32xf32>
      %52 = arith.mulf %50, %51 : vector<8x32xf32>
      %53 = vector.broadcast %32 : vector<1x32xf32> to vector<8x32xf32>
      %54 = arith.addf %52, %53 : vector<8x32xf32>
      %c0_36 = arith.constant 0 : index
      %c0_37 = arith.constant 0 : index
      %55 = vector.load %arg16[%c0_36, %c0_37] : memref<8x32xf32, #tpu.memory_space<vmem>>, vector<8x32xf32>
      tpu.vector_store %arg16[%c0_36, %c0_37], %54 {strides = array<i32>} : memref<8x32xf32, #tpu.memory_space<vmem>>, vector<8x32xf32>,
      %cst_38 = arith.constant 0.000000e+00 : f32
      %56 = vector.broadcast %cst_38 : f32 to vector<8x32xf32>
      %c0_39 = arith.constant 0 : index
      %c0_40 = arith.constant 0 : index
      %57 = vector.load %arg17[%c0_39, %c0_40] : memref<8x32xf32, #tpu.memory_space<vmem>>, vector<8x32xf32>
      tpu.vector_store %arg17[%c0_39, %c0_40], %56 {strides = array<i32>} : memref<8x32xf32, #tpu.memory_space<vmem>>, vector<8x32xf32>,
    } else {
    }
    %c0 = arith.constant 0 : index
    %c0_1 = arith.constant 0 : index
    %3 = vector.load %arg16[%c0, %c0_1] : memref<8x32xf32, #tpu.memory_space<vmem>>, vector<8x32xf32>
    %4 = arith.truncf %3 : vector<8x32xf32> to vector<8x32xbf16>
    %c0_2 = arith.constant 0 : index
    %c0_3 = arith.constant 0 : index
    %5 = vector.load %arg9[%c0_2, %c0_3] : memref<32x64xbf16, #tpu.memory_space<vmem>>, vector<32x64xbf16>
    %cst = arith.constant dense<0.000000e+00> : vector<8x64xf32>
    %6 = tpu.matmul %4, %5, %cst {dimension_numbers = #tpu.dot_dimension_numbers<[1], [0], [0], [1], [0, 0, 1, 1], [], []>} : vector<8x32xbf16>, vector<32x64xbf16>, vector<8x64xf32> -> vector<8x64xf32>
    %c0_4 = arith.constant 0 : index
    %c0_5 = arith.constant 0 : index
    %7 = vector.load %arg10[%c0_4, %c0_5] : memref<1x64xf32, #tpu.memory_space<vmem>>, vector<1x64xf32>
    %8 = vector.broadcast %7 : vector<1x64xf32> to vector<8x64xf32>
    %9 = arith.addf %6, %8 : vector<8x64xf32>
    %cst_6 = arith.constant 0.000000e+00 : f32
    %10 = vector.broadcast %cst_6 : f32 to vector<8x64xf32>
    %11 = arith.maximumf %9, %10 : vector<8x64xf32>
    %c0_7 = arith.constant 0 : index
    %c0_8 = arith.constant 0 : index
    %12 = vector.load %arg17[%c0_7, %c0_8] : memref<8x32xf32, #tpu.memory_space<vmem>>, vector<8x32xf32>
    %13 = arith.truncf %11 : vector<8x64xf32> to vector<8x64xbf16>
    %c0_9 = arith.constant 0 : index
    %c0_10 = arith.constant 0 : index
    %14 = vector.load %arg11[%c0_9, %c0_10] : memref<64x32xbf16, #tpu.memory_space<vmem>>, vector<64x32xbf16>
    %cst_11 = arith.constant dense<0.000000e+00> : vector<8x32xf32>
    %15 = tpu.matmul %13, %14, %cst_11 {dimension_numbers = #tpu.dot_dimension_numbers<[1], [0], [0], [1], [0, 0, 1, 1], [], []>} : vector<8x64xbf16>, vector<64x32xbf16>, vector<8x32xf32> -> vector<8x32xf32>
    %16 = arith.addf %12, %15 : vector<8x32xf32>
    %c0_12 = arith.constant 0 : index
    %c0_13 = arith.constant 0 : index
    %17 = vector.load %arg17[%c0_12, %c0_13] : memref<8x32xf32, #tpu.memory_space<vmem>>, vector<8x32xf32>
    tpu.vector_store %arg17[%c0_12, %c0_13], %16 {strides = array<i32>} : memref<8x32xf32, #tpu.memory_space<vmem>>, vector<8x32xf32>,
    %c0_i32_14 = arith.constant 0 : i32
    %18 = arith.cmpi eq, %arg2, %c0_i32_14 : i32
    %19 = arith.extui %18 : i1 to i32
    %c0_i32_15 = arith.constant 0 : i32
    %20 = arith.cmpi ne, %19, %c0_i32_15 : i32
    scf.if %20 {
      %c0_16 = arith.constant 0 : index
      %c0_17 = arith.constant 0 : index
      %21 = vector.load %arg17[%c0_16, %c0_17] : memref<8x32xf32, #tpu.memory_space<vmem>>, vector<8x32xf32>
      %c0_18 = arith.constant 0 : index
      %c0_19 = arith.constant 0 : index
      %22 = vector.load %arg12[%c0_18, %c0_19] : memref<1x32xf32, #tpu.memory_space<vmem>>, vector<1x32xf32>
      %23 = vector.broadcast %22 : vector<1x32xf32> to vector<8x32xf32>
      %24 = arith.addf %21, %23 : vector<8x32xf32>
      %c0_20 = arith.constant 0 : index
      %c0_21 = arith.constant 0 : index
      %25 = vector.load %arg16[%c0_20, %c0_21] : memref<8x32xf32, #tpu.memory_space<vmem>>, vector<8x32xf32>
      %26 = arith.addf %25, %24 : vector<8x32xf32>
      %c0_22 = arith.constant 0 : index
      %c0_23 = arith.constant 0 : index
      %27 = vector.load %arg13[%c0_22, %c0_23] : memref<1x32xf32, #tpu.memory_space<vmem>>, vector<1x32xf32>
      %c0_24 = arith.constant 0 : index
      %c0_25 = arith.constant 0 : index
      %28 = vector.load %arg14[%c0_24, %c0_25] : memref<1x32xf32, #tpu.memory_space<vmem>>, vector<1x32xf32>
      %cst_26 = arith.constant dense<0.000000e+00> : vector<8xf32>
      %29 = vector.multi_reduction <add>, %26, %cst_26 [1] : vector<8x32xf32> to vector<8xf32>
      %30 = vector.shape_cast %29 : vector<8xf32> to vector<8x1xf32>
      %cst_27 = arith.constant 3.200000e+01 : f32
      %31 = vector.broadcast %cst_27 : f32 to vector<8x1xf32>
      %32 = arith.divf %30, %31 : vector<8x1xf32>
      %33 = vector.broadcast %32 : vector<8x1xf32> to vector<8x32xf32>
      %34 = arith.subf %26, %33 : vector<8x32xf32>
      %35 = arith.mulf %34, %34 : vector<8x32xf32>
      %cst_28 = arith.constant dense<0.000000e+00> : vector<8xf32>
      %36 = vector.multi_reduction <add>, %35, %cst_28 [1] : vector<8x32xf32> to vector<8xf32>
      %37 = vector.shape_cast %36 : vector<8xf32> to vector<8x1xf32>
      %cst_29 = arith.constant 3.200000e+01 : f32
      %38 = vector.broadcast %cst_29 : f32 to vector<8x1xf32>
      %39 = arith.divf %37, %38 : vector<8x1xf32>
      %40 = vector.broadcast %32 : vector<8x1xf32> to vector<8x32xf32>
      %41 = arith.subf %26, %40 : vector<8x32xf32>
      %cst_30 = arith.constant 9.99999974E-6 : f32
      %42 = vector.broadcast %cst_30 : f32 to vector<8x1xf32>
      %43 = arith.addf %39, %42 : vector<8x1xf32>
      %44 = math.rsqrt %43 : vector<8x1xf32>
      %45 = vector.broadcast %44 : vector<8x1xf32> to vector<8x32xf32>
      %46 = arith.mulf %41, %45 : vector<8x32xf32>
      %47 = vector.broadcast %27 : vector<1x32xf32> to vector<8x32xf32>
      %48 = arith.mulf %46, %47 : vector<8x32xf32>
      %49 = vector.broadcast %28 : vector<1x32xf32> to vector<8x32xf32>
      %50 = arith.addf %48, %49 : vector<8x32xf32>
      %c0_31 = arith.constant 0 : index
      %c0_32 = arith.constant 0 : index
      %c0_33 = arith.constant 0 : index
      %51 = vector.load %arg15[%c0_31, %c0_32, %c0_33] : memref<1x8x32xf32, #tpu.memory_space<vmem>>, vector<1x8x32xf32>
      %52 = vector.shape_cast %51 : vector<1x8x32xf32> to vector<8x32xf32>
      %53 = vector.shape_cast %50 : vector<8x32xf32> to vector<1x8x32xf32>
      tpu.vector_store %arg15[%c0_31, %c0_32, %c0_33], %53 {strides = array<i32>} : memref<1x8x32xf32, #tpu.memory_space<vmem>>, vector<1x8x32xf32>,
    } else {
    }
    return
  }
  func.func @transform_0(%arg0: i32, %arg1: i32, %arg2: i32) -> (i32, i32, i32) {
    %c0_i32 = arith.constant 0 : i32
    %c0_i32_0 = arith.constant 0 : i32
    return %arg0, %arg1, %c0_i32 : i32, i32, i32
  }
  func.func @transform_1(%arg0: i32, %arg1: i32, %arg2: i32) -> (i32, i32, i32) {
    %c0_i32 = arith.constant 0 : i32
    %c0_i32_0 = arith.constant 0 : i32
    return %arg0, %arg1, %c0_i32 : i32, i32, i32
  }
  func.func @transform_2(%arg0: i32, %arg1: i32, %arg2: i32) -> (i32, i32) {
    %c0_i32 = arith.constant 0 : i32
    %c0_i32_0 = arith.constant 0 : i32
    %c0_i32_1 = arith.constant 0 : i32
    return %c0_i32, %c0_i32_0 : i32, i32
  }
  func.func @transform_3(%arg0: i32, %arg1: i32, %arg2: i32) -> (i32, i32) {
    %c0_i32 = arith.constant 0 : i32
    %c0_i32_0 = arith.constant 0 : i32
    %c0_i32_1 = arith.constant 0 : i32
    return %c0_i32, %c0_i32_0 : i32, i32
  }
  func.func @transform_4(%arg0: i32, %arg1: i32, %arg2: i32) -> (i32, i32) {
    %c0_i32 = arith.constant 0 : i32
    %c0_i32_0 = arith.constant 0 : i32
    %c0_i32_1 = arith.constant 0 : i32
    return %c0_i32, %c0_i32_0 : i32, i32
  }
  func.func @transform_5(%arg0: i32, %arg1: i32, %arg2: i32) -> (i32, i32) {
    %c0_i32 = arith.constant 0 : i32
    %c0_i32_0 = arith.constant 0 : i32
    %c0_i32_1 = arith.constant 0 : i32
    return %c0_i32, %c0_i32_0 : i32, i32
  }
  func.func @transform_6(%arg0: i32, %arg1: i32, %arg2: i32) -> (i32, i32) {
    %c0_i32 = arith.constant 0 : i32
    %c0_i32_0 = arith.constant 0 : i32
    return %c0_i32, %arg2 : i32, i32
  }
  func.func @transform_7(%arg0: i32, %arg1: i32, %arg2: i32) -> (i32, i32) {
    %c0_i32 = arith.constant 0 : i32
    %c0_i32_0 = arith.constant 0 : i32
    return %c0_i32, %arg2 : i32, i32
  }
  func.func @transform_8(%arg0: i32, %arg1: i32, %arg2: i32) -> (i32, i32) {
    %c0_i32 = arith.constant 0 : i32
    %c0_i32_0 = arith.constant 0 : i32
    return %arg2, %c0_i32 : i32, i32
  }
  func.func @transform_9(%arg0: i32, %arg1: i32, %arg2: i32) -> (i32, i32) {
    %c0_i32 = arith.constant 0 : i32
    %c0_i32_0 = arith.constant 0 : i32
    %c0_i32_1 = arith.constant 0 : i32
    return %c0_i32, %c0_i32_0 : i32, i32
  }
  func.func @transform_10(%arg0: i32, %arg1: i32, %arg2: i32) -> (i32, i32) {
    %c0_i32 = arith.constant 0 : i32
    %c0_i32_0 = arith.constant 0 : i32
    %c0_i32_1 = arith.constant 0 : i32
    return %c0_i32, %c0_i32_0 : i32, i32
  }
  func.func @transform_11(%arg0: i32, %arg1: i32, %arg2: i32) -> (i32, i32) {
    %c0_i32 = arith.constant 0 : i32
    %c0_i32_0 = arith.constant 0 : i32
    %c0_i32_1 = arith.constant 0 : i32
    return %c0_i32, %c0_i32_0 : i32, i32
  }
  func.func @transform_12(%arg0: i32, %arg1: i32, %arg2: i32) -> (i32, i32, i32) {
    %c0_i32 = arith.constant 0 : i32
    %c0_i32_0 = arith.constant 0 : i32
    return %arg0, %arg1, %c0_i32 : i32, i32, i32
  }
}

</mosaic_0001>

<llo_original>
// kernel: encoder_layer.3
$region0: #{encoder_layer.3}
  #allocation0 [shape = 'u32[]', space=smem, size = 0x4, offset = 0x4, fixed_abs, tag = 'smem constant byte address 0x4 - core index']
  #allocation1 [shape = 'u32[144,128]{1,0:T(1,128)}', space=vmem, size = 0x12000, scoped, tag = 'internal scratch']
  %s0 = inlined_call_operand.vmem [shape: f32[2,8,32], index: 0, kind: input, shape index: {}]
  %s1 = inlined_call_operand.hbm [shape: bf16[32,32], index: 1, kind: input, shape index: {}]
  %s2 = inlined_call_operand.hbm [shape: bf16[32,32], index: 2, kind: input, shape index: {}]
  %s3 = inlined_call_operand.hbm [shape: bf16[32,32], index: 3, kind: input, shape index: {}]
  %s4 = inlined_call_operand.vmem [shape: f32[1,32], index: 4, kind: input, shape index: {}]
  %s5 = inlined_call_operand.vmem [shape: f32[1,32], index: 5, kind: input, shape index: {}]
  %s6 = inlined_call_operand.vmem [shape: f32[1,32], index: 6, kind: input, shape index: {}]
  %s7 = inlined_call_operand.vmem [shape: bf16[2,8,32], index: 7, kind: output, shape index: {0}]
  %s8 = inlined_call_operand.vmem [shape: bf16[2,8,32], index: 8, kind: output, shape index: {1}]
  %s9 = inlined_call_operand.vmem [shape: bf16[2,8,32], index: 9, kind: output, shape index: {2}]
  %10 = xla_tuple %s7, %s8, %s9
  %s11 = sld [smem:[#allocation0]]
  $region89: #{encoder_layer.3} parent=0
    _
  %s13 = ssub.s32 1, %s11
  %s14 = scalar_select 0, %s13, %s11
  $region1: #{encoder_layer.3} parent=0
    #allocation2 [shape = 'u8[8192]{0}', space=vmem, size = 0x2000, scoped, tag = 'input window, operand 1, single buffered']
    #allocation3 [shape = 's32[2]{0}', space=sflag, size = 0x8, scoped, tag = 'scoped memory for encoder_layer.3']
    #allocation4 [shape = 'u8[8192]{0}', space=vmem, size = 0x2000, scoped, tag = 'input window, operand 2, single buffered']
    #allocation5 [shape = 's32[1]{0}', space=sflag, size = 0x4, scoped, tag = 'scoped memory for encoder_layer.3']
    #allocation6 [shape = 'u8[8192]{0}', space=vmem, size = 0x2000, scoped, tag = 'input window, operand 3, single buffered']
    %15 = vsyncpa [#allocation3], 0
    %16 = vsyncpa [#allocation5], 0
    loop: start=0, step=1, limit=4
    $region2: #{encoder_layer.3} parent=1 // loop_pre_header
      _
    $region3: #{encoder_layer.3} parent=1 // loop_header
      %s18 = sphi 0, %s22
      %p19 = scmp.ge.s32.totalorder %s18, 4
      %s25 = sphi 0, %s37
      %s26 = sphi 0, %s33
      %s27 = sphi 0, %s25
      %s28 = sphi 0, %s26
      %s29 = sphi 0, %s27
      %s30 = sphi 0, %s28
      %s42 = sphi 0, %s44
      %s45 = sphi 0, %s42
      %s46 = sphi 0, %s45
      %s62 = sphi 0, %s46
      %s66 = sphi 0, %s66
      %s68 = sphi 0, %s66
      %s69 = sphi 0, %s68
      %s83 = sphi 0, %s69
      %s87 = sphi 0, %s87
      %s89 = sphi 0, %s87
      %s90 = sphi 0, %s89
      %s104 = sphi 0, %s90
      %s108 = sphi 0, %s108
      %s110 = sphi 0, %s108
      %s111 = sphi 0, %s110
      %s125 = sphi 0, %s111
      %s129 = sphi 0, %s129
      %s131 = sphi 0, %s129
      %s132 = sphi 0, %s131
      %s146 = sphi 0, %s132
      %s150 = sphi 0, %s150
      %s152 = sphi 0, %s150
      %s153 = sphi 0, %s152
      %s167 = sphi 0, %s153
      %s171 = sphi 0, %s171
      %s173 = sphi 0, %s171
      %s174 = sphi 0, %s173
      %s188 = sphi 0, %s174
      %s196 = sphi 0, %s198
      %s199 = sphi 0, %s196
      %s200 = sphi 0, %s199
      %s216 = sphi 0, %s200
      %s224 = sphi 0, %s226
      %s227 = sphi 0, %s224
      %s228 = sphi 0, %s227
      %s244 = sphi 0, %s228
      %s252 = sphi 0, %s254
      %s255 = sphi 0, %s252
      %s256 = sphi 0, %s255
      %s272 = sphi 0, %s256
    $region4: #{encoder_layer.3} parent=1 // loop_header_branch
      %21 = sbr.rel (%p19) target = $region8
    $region5: #{encoder_layer.3} parent=1 // loop_body
      %s23 = ssub.s32 %s18, 1
      %s24 = ssub.s32 %s18, 2
      %s31 = sadd.s32 1, %s26
      %p32 = scmp.ge.s32.totalorder %s31, 1
      %s33 = scalar_select %p32, 0, %s31
      %s34 = sadd.s32 1, %s25
      %s35 = scalar_select %p32, %s34, %s25
      %p36 = scmp.ge.s32.totalorder %s35, 2
      %s37 = scalar_select %p36, 0, %s35
      %s38 = ssub.s32 %s25, %s37
      %s39 = ssub.s32 %s26, %s33
      %s40 = sor.u32 %s38, %s39
      %p41 = scmp.eq.s32.totalorder %s40, 0
      %s43 = sadd.s32 %s42, 1
      %s44 = scalar_select %p41, %s42, %s43
      %p47 = pneg %p41
      %p48 = scmp.eq.s32.totalorder %s18, 1
      %p49 = por %p47, %p48
      %p50 = scmp.ne.s32.totalorder %s42, %s45
      %p51 = scmp.eq.s32.totalorder %s18, 0
      %p52 = por %p50, %p51
      %p53 = scmp.ne.s32.totalorder %s42, %s45
      %p54 = scmp.eq.s32.totalorder %s23, 1
      %p55 = por %p53, %p54
      %p56 = scmp.ne.s32.totalorder %s45, %s46
      %p57 = scmp.eq.s32.totalorder %s23, 0
      %p58 = por %p56, %p57
      %p59 = scmp.ne.s32.totalorder %s45, %s46
      %p60 = scmp.eq.s32.totalorder %s24, 1
      %p61 = por %p59, %p60
      %p63 = scmp.ne.s32.totalorder %s46, %s62
      %p64 = scmp.eq.s32.totalorder %s24, 0
      %p65 = por %p63, %p64
      %s67 = sadd.s32 %s66, 1
      %p70 = scmp.eq.s32.totalorder %s18, 1
      %p71 = scmp.ne.s32.totalorder %s66, %s68
      %p72 = scmp.eq.s32.totalorder %s18, 0
      %p73 = por %p71, %p72
      %p74 = scmp.ne.s32.totalorder %s66, %s68
      %p75 = scmp.eq.s32.totalorder %s23, 1
      %p76 = por %p74, %p75
      %p77 = scmp.ne.s32.totalorder %s68, %s69
      %p78 = scmp.eq.s32.totalorder %s23, 0
      %p79 = por %p77, %p78
      %p80 = scmp.ne.s32.totalorder %s68, %s69
      %p81 = scmp.eq.s32.totalorder %s24, 1
      %p82 = por %p80, %p81
      %p84 = scmp.ne.s32.totalorder %s69, %s83
      %p85 = scmp.eq.s32.totalorder %s24, 0
      %p86 = por %p84, %p85
      %s88 = sadd.s32 %s87, 1
      %p91 = scmp.eq.s32.totalorder %s18, 1
      %p92 = scmp.ne.s32.totalorder %s87, %s89
      %p93 = scmp.eq.s32.totalorder %s18, 0
      %p94 = por %p92, %p93
      %p95 = scmp.ne.s32.totalorder %s87, %s89
      %p96 = scmp.eq.s32.totalorder %s23, 1
      %p97 = por %p95, %p96
      %p98 = scmp.ne.s32.totalorder %s89, %s90
      %p99 = scmp.eq.s32.totalorder %s23, 0
      %p100 = por %p98, %p99
      %p101 = scmp.ne.s32.totalorder %s89, %s90
      %p102 = scmp.eq.s32.totalorder %s24, 1
      %p103 = por %p101, %p102
      %p105 = scmp.ne.s32.totalorder %s90, %s104
      %p106 = scmp.eq.s32.totalorder %s24, 0
      %p107 = por %p105, %p106
      %s109 = sadd.s32 %s108, 1
      %p112 = scmp.eq.s32.totalorder %s18, 1
      %p113 = scmp.ne.s32.totalorder %s108, %s110
      %p114 = scmp.eq.s32.totalorder %s18, 0
      %p115 = por %p113, %p114
      %p116 = scmp.ne.s32.totalorder %s108, %s110
      %p117 = scmp.eq.s32.totalorder %s23, 1
      %p118 = por %p116, %p117
      %p119 = scmp.ne.s32.totalorder %s110, %s111
      %p120 = scmp.eq.s32.totalorder %s23, 0
      %p121 = por %p119, %p120
      %p122 = scmp.ne.s32.totalorder %s110, %s111
      %p123 = scmp.eq.s32.totalorder %s24, 1
      %p124 = por %p122, %p123
      %p126 = scmp.ne.s32.totalorder %s111, %s125
      %p127 = scmp.eq.s32.totalorder %s24, 0
      %p128 = por %p126, %p127
      %s130 = sadd.s32 %s129, 1
      %p133 = scmp.eq.s32.totalorder %s18, 1
      %p134 = scmp.ne.s32.totalorder %s129, %s131
      %p135 = scmp.eq.s32.totalorder %s18, 0
      %p136 = por %p134, %p135
      %p137 = scmp.ne.s32.totalorder %s129, %s131
      %p138 = scmp.eq.s32.totalorder %s23, 1
      %p139 = por %p137, %p138
      %p140 = scmp.ne.s32.totalorder %s131, %s132
      %p141 = scmp.eq.s32.totalorder %s23, 0
      %p142 = por %p140, %p141
      %p143 = scmp.ne.s32.totalorder %s131, %s132
      %p144 = scmp.eq.s32.totalorder %s24, 1
      %p145 = por %p143, %p144
      %p147 = scmp.ne.s32.totalorder %s132, %s146
      %p148 = scmp.eq.s32.totalorder %s24, 0
      %p149 = por %p147, %p148
      %s151 = sadd.s32 %s150, 1
      %p154 = scmp.eq.s32.totalorder %s18, 1
      %p155 = scmp.ne.s32.totalorder %s150, %s152
      %p156 = scmp.eq.s32.totalorder %s18, 0
      %p157 = por %p155, %p156
      %p158 = scmp.ne.s32.totalorder %s150, %s152
      %p159 = scmp.eq.s32.totalorder %s23, 1
      %p160 = por %p158, %p159
      %p161 = scmp.ne.s32.totalorder %s152, %s153
      %p162 = scmp.eq.s32.totalorder %s23, 0
      %p163 = por %p161, %p162
      %p164 = scmp.ne.s32.totalorder %s152, %s153
      %p165 = scmp.eq.s32.totalorder %s24, 1
      %p166 = por %p164, %p165
      %p168 = scmp.ne.s32.totalorder %s153, %s167
      %p169 = scmp.eq.s32.totalorder %s24, 0
      %p170 = por %p168, %p169
      %s172 = sadd.s32 %s171, 1
      %p175 = scmp.eq.s32.totalorder %s18, 1
      %p176 = scmp.ne.s32.totalorder %s171, %s173
      %p177 = scmp.eq.s32.totalorder %s18, 0
      %p178 = por %p176, %p177
      %p179 = scmp.ne.s32.totalorder %s171, %s173
      %p180 = scmp.eq.s32.totalorder %s23, 1
      %p181 = por %p179, %p180
      %p182 = scmp.ne.s32.totalorder %s173, %s174
      %p183 = scmp.eq.s32.totalorder %s23, 0
      %p184 = por %p182, %p183
      %p185 = scmp.ne.s32.totalorder %s173, %s174
      %p186 = scmp.eq.s32.totalorder %s24, 1
      %p187 = por %p185, %p186
      %p189 = scmp.ne.s32.totalorder %s174, %s188
      %p190 = scmp.eq.s32.totalorder %s24, 0
      %p191 = por %p189, %p190
      %s192 = ssub.s32 %s25, %s37
      %s193 = ssub.s32 %s26, %s33
      %s194 = sor.u32 %s192, %s193
      %p195 = scmp.eq.s32.totalorder %s194, 0
      %s197 = sadd.s32 %s196, 1
      %s198 = scalar_select %p195, %s196, %s197
      %p201 = pneg %p195
      %p202 = scmp.eq.s32.totalorder %s18, 1
      %p203 = por %p201, %p202
      %p204 = scmp.ne.s32.totalorder %s196, %s199
      %p205 = scmp.eq.s32.totalorder %s18, 0
      %p206 = por %p204, %p205
      %p207 = scmp.ne.s32.totalorder %s196, %s199
      %p208 = scmp.eq.s32.totalorder %s23, 1
      %p209 = por %p207, %p208
      %p210 = scmp.ne.s32.totalorder %s199, %s200
      %p211 = scmp.eq.s32.totalorder %s23, 0
      %p212 = por %p210, %p211
      %p213 = scmp.ne.s32.totalorder %s199, %s200
      %p214 = scmp.eq.s32.totalorder %s24, 1
      %p215 = por %p213, %p214
      %p217 = scmp.ne.s32.totalorder %s200, %s216
      %p218 = scmp.eq.s32.totalorder %s24, 0
      %p219 = por %p217, %p218
      %s220 = ssub.s32 %s25, %s37
      %s221 = ssub.s32 %s26, %s33
      %s222 = sor.u32 %s220, %s221
      %p223 = scmp.eq.s32.totalorder %s222, 0
      %s225 = sadd.s32 %s224, 1
      %s226 = scalar_select %p223, %s224, %s225
      %p229 = pneg %p223
      %p230 = scmp.eq.s32.totalorder %s18, 1
      %p231 = por %p229, %p230
      %p232 = scmp.ne.s32.totalorder %s224, %s227
      %p233 = scmp.eq.s32.totalorder %s18, 0
      %p234 = por %p232, %p233
      %p235 = scmp.ne.s32.totalorder %s224, %s227
      %p236 = scmp.eq.s32.totalorder %s23, 1
      %p237 = por %p235, %p236
      %p238 = scmp.ne.s32.totalorder %s227, %s228
      %p239 = scmp.eq.s32.totalorder %s23, 0
      %p240 = por %p238, %p239
      %p241 = scmp.ne.s32.totalorder %s227, %s228
      %p242 = scmp.eq.s32.totalorder %s24, 1
      %p243 = por %p241, %p242
      %p245 = scmp.ne.s32.totalorder %s228, %s244
      %p246 = scmp.eq.s32.totalorder %s24, 0
      %p247 = por %p245, %p246
      %s248 = ssub.s32 %s25, %s37
      %s249 = ssub.s32 %s26, %s33
      %s250 = sor.u32 %s248, %s249
      %p251 = scmp.eq.s32.totalorder %s250, 0
      %s253 = sadd.s32 %s252, 1
      %s254 = scalar_select %p251, %s252, %s253
      %p257 = pneg %p251
      %p258 = scmp.eq.s32.totalorder %s18, 1
      %p259 = por %p257, %p258
      %p260 = scmp.ne.s32.totalorder %s252, %s255
      %p261 = scmp.eq.s32.totalorder %s18, 0
      %p262 = por %p260, %p261
      %p263 = scmp.ne.s32.totalorder %s252, %s255
      %p264 = scmp.eq.s32.totalorder %s23, 1
      %p265 = por %p263, %p264
      %p266 = scmp.ne.s32.totalorder %s255, %s256
      %p267 = scmp.eq.s32.totalorder %s23, 0
      %p268 = por %p266, %p267
      %p269 = scmp.ne.s32.totalorder %s255, %s256
      %p270 = scmp.eq.s32.totalorder %s24, 1
      %p271 = por %p269, %p270
      %p273 = scmp.ne.s32.totalorder %s256, %s272
      %p274 = scmp.eq.s32.totalorder %s24, 0
      %p275 = por %p273, %p274
      %p276 = scmp.le.s32.totalorder 1, %s18
      %p277 = scmp.lt.s32.totalorder %s18, 3
      %p278 = pnand %p276, %p277
      %p279 = pneg %p278
      // Predicated region
      $region9: #{encoder_layer.3} parent=5 // pred_check
        _
      $region10: #{encoder_layer.3} parent=5 // pred_check_branch
        %281 = sbr.rel (%p278) target = $region12
      $region11: #{encoder_layer.3} parent=5 // pred_region
        %s282 = ssub.s32 %s18, 1
        // Predicated region
        $region13: #{encoder_layer.3} parent=11 // pred_check
          %p283 = pneg %p79
        $region14: #{encoder_layer.3} parent=11 // pred_check_branch
          %285 = sbr.rel (%p283) target = $region16
        $region15: #{encoder_layer.3} parent=11 // pred_region
          %s287 = ssub.s32 256, 256
          %288 = vsyncadd [#allocation3], %s287
          %s289 = sshll.u32 [#allocation2], 4
          %s290 = int_to_ptr.vmem [resolvable:$true] %s289
          %295 = dma.hbm_to_vmem [thread:$0]  %s1, 256, %s290, [#allocation3], 64, 64, 4
        $region16: #{encoder_layer.3} parent=11 // pred_fallthru
          _
        // Predicated region
        $region17: #{encoder_layer.3} parent=11 // pred_check
          %p296 = pneg %p100
        $region18: #{encoder_layer.3} parent=11 // pred_check_branch
          %298 = sbr.rel (%p296) target = $region20
        $region19: #{encoder_layer.3} parent=11 // pred_region
          %s300 = ssub.s32 256, 256
          %301 = vsyncadd [#allocation5], %s300
          %s302 = sshll.u32 [#allocation4], 4
          %s303 = int_to_ptr.vmem [resolvable:$true] %s302
          %308 = dma.hbm_to_vmem [thread:$0]  %s2, 256, %s303, [#allocation5], 64, 64, 4
        $region20: #{encoder_layer.3} parent=11 // pred_fallthru
          _
        // Predicated region
        $region21: #{encoder_layer.3} parent=11 // pred_check
          %p309 = pneg %p121
        $region22: #{encoder_layer.3} parent=11 // pred_check_branch
          %311 = sbr.rel (%p309) target = $region24
        $region23: #{encoder_layer.3} parent=11 // pred_region
          %s313 = ssub.s32 256, 256
          %314 = vsyncadd [#allocation5], %s313
          %s315 = sshll.u32 [#allocation6], 4
          %s316 = int_to_ptr.vmem [resolvable:$true] %s315
          %321 = dma.hbm_to_vmem [thread:$0]  %s3, 256, %s316, [#allocation5], 64, 64, 4
        $region24: #{encoder_layer.3} parent=11 // pred_fallthru
          _
        // Predicated region
        $region25: #{encoder_layer.3} parent=11 // pred_check
          %p322 = pneg %p142
        $region26: #{encoder_layer.3} parent=11 // pred_check_branch
          %324 = sbr.rel (%p322) target = $region28
        $region27: #{encoder_layer.3} parent=11 // pred_region
          _
        $region28: #{encoder_layer.3} parent=11 // pred_fallthru
          _
        // Predicated region
        $region29: #{encoder_layer.3} parent=11 // pred_check
          %p325 = pneg %p163
        $region30: #{encoder_layer.3} parent=11 // pred_check_branch
          %327 = sbr.rel (%p325) target = $region32
        $region31: #{encoder_layer.3} parent=11 // pred_region
          _
        $region32: #{encoder_layer.3} parent=11 // pred_fallthru
          _
        // Predicated region
        $region33: #{encoder_layer.3} parent=11 // pred_check
          %p328 = pneg %p184
        $region34: #{encoder_layer.3} parent=11 // pred_check_branch
          %330 = sbr.rel (%p328) target = $region36
        $region35: #{encoder_layer.3} parent=11 // pred_region
          _
        $region36: #{encoder_layer.3} parent=11 // pred_fallthru
          _
      $region12: #{encoder_layer.3} parent=5 // pred_fallthru
        _
      %p331 = scmp.lt.s32.totalorder %s18, 2
      // Predicated region
      $region37: #{encoder_layer.3} parent=5 // pred_check
        %p332 = pneg %p331
      $region38: #{encoder_layer.3} parent=5 // pred_check_branch
        %334 = sbr.rel (%p332) target = $region40
      $region39: #{encoder_layer.3} parent=5 // pred_region
        // Predicated region
        $region41: #{encoder_layer.3} parent=39 // pred_check
          %p335 = pneg %p52
        $region42: #{encoder_layer.3} parent=39 // pred_check_branch
          %337 = sbr.rel (%p335) target = $region44
        $region43: #{encoder_layer.3} parent=39 // pred_region
          %p338 = scmp.lt.s32.totalorder %s25, 1
          %s339 = scalar_select %p338, %s25, 1
          %p340 = scmp.lt.s32.totalorder %s26, 0
          %s341 = scalar_select %p340, %s26, 0
          %s342 = sadd.s32 %s341, %s339
          %s343 = smul.addr %s342, 8
          %s344 = scalar_lea.vmem %s0, %s343
        $region44: #{encoder_layer.3} parent=39 // pred_fallthru
          _
      $region40: #{encoder_layer.3} parent=5 // pred_fallthru
        _
      %p345 = scmp.le.s32.totalorder 1, %s18
      %p346 = scmp.lt.s32.totalorder %s18, 3
      %p347 = pnand %p345, %p346
      %p348 = pneg %p347
      // Predicated region
      $region45: #{encoder_layer.3} parent=5 // pred_check
        _
      $region46: #{encoder_layer.3} parent=5 // pred_check_branch
        %350 = sbr.rel (%p347) target = $region48
      $region47: #{encoder_layer.3} parent=5 // pred_region
        %s351 = ssub.s32 %s18, 1
        // Predicated region
        $region49: #{encoder_layer.3} parent=47 // pred_check
          %p352 = pneg %p79
        $region50: #{encoder_layer.3} parent=47 // pred_check_branch
          %354 = sbr.rel (%p352) target = $region52
        $region51: #{encoder_layer.3} parent=47 // pred_region
          %355 = dma.done [#allocation3], 256
        $region52: #{encoder_layer.3} parent=47 // pred_fallthru
          _
        // Predicated region
        $region53: #{encoder_layer.3} parent=47 // pred_check
          %p356 = pneg %p100
        $region54: #{encoder_layer.3} parent=47 // pred_check_branch
          %358 = sbr.rel (%p356) target = $region56
        $region55: #{encoder_layer.3} parent=47 // pred_region
          %359 = dma.done [#allocation5], 256
        $region56: #{encoder_layer.3} parent=47 // pred_fallthru
          _
        // Predicated region
        $region57: #{encoder_layer.3} parent=47 // pred_check
          %p360 = pneg %p121
        $region58: #{encoder_layer.3} parent=47 // pred_check_branch
          %362 = sbr.rel (%p360) target = $region60
        $region59: #{encoder_layer.3} parent=47 // pred_region
          %363 = dma.done [#allocation5], 256
        $region60: #{encoder_layer.3} parent=47 // pred_fallthru
          _
        %p364 = scmp.lt.s32.totalorder %s27, 1
        %s365 = scalar_select %p364, %s27, 1
        %p366 = scmp.lt.s32.totalorder %s28, 0
        %s367 = scalar_select %p366, %s28, 0
        %s368 = sadd.s32 %s367, %s365
        %s369 = smul.addr %s368, 8
        %s370 = scalar_lea.vmem %s0, %s369
        %p371 = pneg %p58
        %p372 = pneg %p55
        %p373 = pneg %p79
        %p374 = pneg %p76
        %p375 = pneg %p100
        %p376 = pneg %p97
        %p377 = pneg %p121
        %p378 = pneg %p118
        %p379 = pneg %p142
        %p380 = pneg %p139
        %p381 = pneg %p163
        %p382 = pneg %p160
        %p383 = pneg %p184
        %p384 = pneg %p181
        %p385 = pneg %p212
        %p386 = pneg %p209
        %p387 = scmp.lt.s32.totalorder %s27, 1
        %s388 = scalar_select %p387, %s27, 1
        %p389 = scmp.lt.s32.totalorder %s28, 0
        %s390 = scalar_select %p389, %s28, 0
        %s391 = sadd.s32 %s390, %s388
        %s392 = smul.addr %s391, 4
        %s393 = scalar_lea.vmem %s7, %s392
        %p394 = pneg %p240
        %p395 = pneg %p237
        %p396 = scmp.lt.s32.totalorder %s27, 1
        %s397 = scalar_select %p396, %s27, 1
        %p398 = scmp.lt.s32.totalorder %s28, 0
        %s399 = scalar_select %p398, %s28, 0
        %s400 = sadd.s32 %s399, %s397
        %s401 = smul.addr %s400, 4
        %s402 = scalar_lea.vmem %s8, %s401
        %p403 = pneg %p268
        %p404 = pneg %p265
        %p405 = scmp.lt.s32.totalorder %s27, 1
        %s406 = scalar_select %p405, %s27, 1
        %p407 = scmp.lt.s32.totalorder %s28, 0
        %s408 = scalar_select %p407, %s28, 0
        %s409 = sadd.s32 %s408, %s406
        %s410 = smul.addr %s409, 4
        %s411 = scalar_lea.vmem %s9, %s410
        %p412 = scmp.lt.s32.totalorder %s27, 1
        %s413 = scalar_select %p412, %s27, 1
        %p414 = scmp.lt.s32.totalorder %s28, 0
        %s415 = scalar_select %p414, %s28, 0
        %s416 = sadd.s32 %s415, %s413
        %s417 = smul.addr %s416, 8
        %s418 = scalar_lea.vmem %s0, %s417
        %p419 = scmp.lt.s32.totalorder %s27, 1
        %s420 = scalar_select %p419, %s27, 1
        %p421 = scmp.lt.s32.totalorder %s28, 0
        %s422 = scalar_select %p421, %s28, 0
        %s423 = sadd.s32 %s422, %s420
        %s424 = smul.addr %s423, 4
        %s425 = scalar_lea.vmem %s7, %s424
        %p426 = scmp.lt.s32.totalorder %s27, 1
        %s427 = scalar_select %p426, %s27, 1
        %p428 = scmp.lt.s32.totalorder %s28, 0
        %s429 = scalar_select %p428, %s28, 0
        %s430 = sadd.s32 %s429, %s427
        %s431 = smul.addr %s430, 4
        %s432 = scalar_lea.vmem %s8, %s431
        %p433 = scmp.lt.s32.totalorder %s27, 1
        %s434 = scalar_select %p433, %s27, 1
        %p435 = scmp.lt.s32.totalorder %s28, 0
        %s436 = scalar_select %p435, %s28, 0
        %s437 = sadd.s32 %s436, %s434
        %s438 = smul.addr %s437, 4
        %s439 = scalar_lea.vmem %s9, %s438
        %v441 = vld [vmem:[%s418] sm:$0xff]
        %v442 = vpack.c.bf16 %v441, %v441
        %v443 = vld [vmem:[#allocation2] sm:$0xf]
        %v444 = vld [vmem:[#allocation2 + $0x4] sm:$0xf]
        %v445 = vld [vmem:[#allocation2 + $0x8] sm:$0xf]
        %v446 = vld [vmem:[#allocation2 + $0xc] sm:$0xf]
        %v447 = vld [vmem:[%s4] sm:$0x1]
        %v449 = vlaneseq
        %v450 = vshrl.u32 %v449, 7
        %v451 = vsub.s32 0, %v450
        %v452 = vrot.slane %v447, %v451
        %v458 = vunpack.c.l.b16 %v443
        %v459 = vunpack.c.l.b16 %v444
        %v460 = vunpack.c.l.b16 %v445
        %v461 = vunpack.c.l.b16 %v446
        %v462 = vpack.c.b16 %v459, %v458
        %v463 = vpack.c.b16 %v461, %v460
        %vm466 = vcmask 261120
        %v468 = vsel %vm466, %v442, 0
        %470 = vmatprep.subr.bf16.mxu0 0
        %471 = vmatpush1.bf16.msra.mxu0 0
        %472 = vmatprep.subr.bf16.mxu0 0
        %473 = vmatpush1.bf16.msra.mxu0 0
        %474 = vmatprep.subr.bf16.mxu0 0
        %475 = vmatpush1.bf16.msra.mxu0 0
        %476 = vmatprep.subr.bf16.mxu0 0
        %477 = vmatpush1.bf16.msra.mxu0 0
        %478 = vmatprep.subr.bf16.mxu0 0
        %479 = vmatpush1.bf16.msra.mxu0 0
        %480 = vmatprep.subr.bf16.mxu0 0
        %481 = vmatpush1.bf16.msra.mxu0 0
        %482 = vmatprep.subr.bf16.mxu0 0
        %483 = vmatpush1.bf16.msra.mxu0 %v463
        %484 = vmatprep.subr.bf16.mxu0 0
        %485 = vmatpush1.bf16.msra.mxu0 %v462
        %486 = vmatprep.subr.bf16.mxu0 0
        %487 = vmatpush2.bf16.msra.mxu0 0
        %488 = vmatprep.subr.bf16.mxu0 0
        %489 = vmatpush2.bf16.msra.mxu0 0
        %490 = vmatprep.subr.bf16.mxu0 0
        %491 = vmatpush2.bf16.msra.mxu0 0
        %492 = vmatprep.subr.bf16.mxu0 0
        %493 = vmatpush2.bf16.msra.mxu0 0
        %494 = vmatprep.subr.bf16.mxu0 0
        %495 = vmatpush2.bf16.msra.mxu0 0
        %496 = vmatprep.subr.bf16.mxu0 0
        %497 = vmatpush2.bf16.msra.mxu0 0
        %498 = vmatprep.subr.bf16.mxu0 0
        %499 = vmatpush2.bf16.msra.mxu0 0
        %500 = vmatprep.subr.bf16.mxu0 0
        %501 = vmatpush2.bf16.msra.mxu0 0
        %502 = vmatprep.mubr.bf16.mxu0 0
        %503 = vmatmul.mubr.bf16.gmra.mxu0 %v468
        %v504 = vpop.f32.mrf.mxu0
        %v505 = vadd.f32 %v452, %v504
        %v506 = vpop.f32.mrf.mxu0
        %v507 = vpop.f32.mrf.mxu0
        %v508 = vpop.f32.mrf.mxu0
        %509 = vdwg.mxu0
        %v510 = vld [vmem:[#allocation4] sm:$0xf]
        %v511 = vld [vmem:[#allocation4 + $0x4] sm:$0xf]
        %v512 = vld [vmem:[#allocation4 + $0x8] sm:$0xf]
        %v513 = vld [vmem:[#allocation4 + $0xc] sm:$0xf]
        %v514 = vld [vmem:[%s5] sm:$0x1]
        %v516 = vlaneseq
        %v517 = vshrl.u32 %v516, 7
        %v518 = vsub.s32 0, %v517
        %v519 = vrot.slane %v514, %v518
        %v525 = vunpack.c.l.b16 %v510
        %v526 = vunpack.c.l.b16 %v511
        %v527 = vunpack.c.l.b16 %v512
        %v528 = vunpack.c.l.b16 %v513
        %v529 = vpack.c.b16 %v526, %v525
        %v530 = vpack.c.b16 %v528, %v527
        %533 = vmatprep.subr.bf16.mxu0 0
        %534 = vmatpush1.bf16.msra.mxu0 0
        %535 = vmatprep.subr.bf16.mxu0 0
        %536 = vmatpush1.bf16.msra.mxu0 0
        %537 = vmatprep.subr.bf16.mxu0 0
        %538 = vmatpush1.bf16.msra.mxu0 0
        %539 = vmatprep.subr.bf16.mxu0 0
        %540 = vmatpush1.bf16.msra.mxu0 0
        %541 = vmatprep.subr.bf16.mxu0 0
        %542 = vmatpush1.bf16.msra.mxu0 0
        %543 = vmatprep.subr.bf16.mxu0 0
        %544 = vmatpush1.bf16.msra.mxu0 0
        %545 = vmatprep.subr.bf16.mxu0 0
        %546 = vmatpush1.bf16.msra.mxu0 %v530
        %547 = vmatprep.subr.bf16.mxu0 0
        %548 = vmatpush1.bf16.msra.mxu0 %v529
        %549 = vmatprep.subr.bf16.mxu0 0
        %550 = vmatpush2.bf16.msra.mxu0 0
        %551 = vmatprep.subr.bf16.mxu0 0
        %552 = vmatpush2.bf16.msra.mxu0 0
        %553 = vmatprep.subr.bf16.mxu0 0
        %554 = vmatpush2.bf16.msra.mxu0 0
        %555 = vmatprep.subr.bf16.mxu0 0
        %556 = vmatpush2.bf16.msra.mxu0 0
        %557 = vmatprep.subr.bf16.mxu0 0
        %558 = vmatpush2.bf16.msra.mxu0 0
        %559 = vmatprep.subr.bf16.mxu0 0
        %560 = vmatpush2.bf16.msra.mxu0 0
        %561 = vmatprep.subr.bf16.mxu0 0
        %562 = vmatpush2.bf16.msra.mxu0 0
        %563 = vmatprep.subr.bf16.mxu0 0
        %564 = vmatpush2.bf16.msra.mxu0 0
        %565 = vmatprep.mubr.bf16.mxu0 0
        %566 = vmatmul.mubr.bf16.gmra.mxu0 %v468
        %v567 = vpop.f32.mrf.mxu0
        %v568 = vadd.f32 %v519, %v567
        %v569 = vpop.f32.mrf.mxu0
        %v570 = vpop.f32.mrf.mxu0
        %v571 = vpop.f32.mrf.mxu0
        %572 = vdwg.mxu0
        %v573 = vld [vmem:[#allocation6] sm:$0xf]
        %v574 = vld [vmem:[#allocation6 + $0x4] sm:$0xf]
        %v575 = vld [vmem:[#allocation6 + $0x8] sm:$0xf]
        %v576 = vld [vmem:[#allocation6 + $0xc] sm:$0xf]
        %v577 = vld [vmem:[%s6] sm:$0x1]
        %v579 = vlaneseq
        %v580 = vshrl.u32 %v579, 7
        %v581 = vsub.s32 0, %v580
        %v582 = vrot.slane %v577, %v581
        %v588 = vunpack.c.l.b16 %v573
        %v589 = vunpack.c.l.b16 %v574
        %v590 = vunpack.c.l.b16 %v575
        %v591 = vunpack.c.l.b16 %v576
        %v592 = vpack.c.b16 %v589, %v588
        %v593 = vpack.c.b16 %v591, %v590
        %596 = vmatprep.subr.bf16.mxu0 0
        %597 = vmatpush1.bf16.msra.mxu0 0
        %598 = vmatprep.subr.bf16.mxu0 0
        %599 = vmatpush1.bf16.msra.mxu0 0
        %600 = vmatprep.subr.bf16.mxu0 0
        %601 = vmatpush1.bf16.msra.mxu0 0
        %602 = vmatprep.subr.bf16.mxu0 0
        %603 = vmatpush1.bf16.msra.mxu0 0
        %604 = vmatprep.subr.bf16.mxu0 0
        %605 = vmatpush1.bf16.msra.mxu0 0
        %606 = vmatprep.subr.bf16.mxu0 0
        %607 = vmatpush1.bf16.msra.mxu0 0
        %608 = vmatprep.subr.bf16.mxu0 0
        %609 = vmatpush1.bf16.msra.mxu0 %v593
        %610 = vmatprep.subr.bf16.mxu0 0
        %611 = vmatpush1.bf16.msra.mxu0 %v592
        %612 = vmatprep.subr.bf16.mxu0 0
        %613 = vmatpush2.bf16.msra.mxu0 0
        %614 = vmatprep.subr.bf16.mxu0 0
        %615 = vmatpush2.bf16.msra.mxu0 0
        %616 = vmatprep.subr.bf16.mxu0 0
        %617 = vmatpush2.bf16.msra.mxu0 0
        %618 = vmatprep.subr.bf16.mxu0 0
        %619 = vmatpush2.bf16.msra.mxu0 0
        %620 = vmatprep.subr.bf16.mxu0 0
        %621 = vmatpush2.bf16.msra.mxu0 0
        %622 = vmatprep.subr.bf16.mxu0 0
        %623 = vmatpush2.bf16.msra.mxu0 0
        %624 = vmatprep.subr.bf16.mxu0 0
        %625 = vmatpush2.bf16.msra.mxu0 0
        %626 = vmatprep.subr.bf16.mxu0 0
        %627 = vmatpush2.bf16.msra.mxu0 0
        %628 = vmatprep.mubr.bf16.mxu0 0
        %629 = vmatmul.mubr.bf16.gmra.mxu0 %v468
        %v630 = vpop.f32.mrf.mxu0
        %v631 = vadd.f32 %v582, %v630
        %v632 = vpop.f32.mrf.mxu0
        %v633 = vpop.f32.mrf.mxu0
        %v634 = vpop.f32.mrf.mxu0
        %635 = vdwg.mxu0
        %v636 = vpack.c.bf16 %v505, %v505
        %vm637 = vcmask 257024
        %638 = vst.msk [vmem:[%s425] sm:$0xf] %vm637, %v636
        %v639 = vpack.c.bf16 %v568, %v568
        %640 = vst.msk [vmem:[%s432] sm:$0xf] %vm637, %v639
        %v641 = vpack.c.bf16 %v631, %v631
        %642 = vst.msk [vmem:[%s439] sm:$0xf] %vm637, %v641
        %p643 = scmp.lt.s32.totalorder %s27, 1
        %s644 = scalar_select %p643, %s27, 1
        %p645 = scmp.lt.s32.totalorder %s28, 0
        %s646 = scalar_select %p645, %s28, 0
        %s647 = sadd.s32 %s646, %s644
        %s648 = smul.addr %s647, 4
        %s649 = scalar_lea.vmem %s7, %s648
        %p650 = scmp.lt.s32.totalorder %s27, 1
        %s651 = scalar_select %p650, %s27, 1
        %p652 = scmp.lt.s32.totalorder %s28, 0
        %s653 = scalar_select %p652, %s28, 0
        %s654 = sadd.s32 %s653, %s651
        %s655 = smul.addr %s654, 4
        %s656 = scalar_lea.vmem %s8, %s655
        %p657 = scmp.lt.s32.totalorder %s27, 1
        %s658 = scalar_select %p657, %s27, 1
        %p659 = scmp.lt.s32.totalorder %s28, 0
        %s660 = scalar_select %p659, %s28, 0
        %s661 = sadd.s32 %s660, %s658
        %s662 = smul.addr %s661, 4
        %s663 = scalar_lea.vmem %s9, %s662
        // Predicated region
        $region61: #{encoder_layer.3} parent=47 // pred_check
          %p664 = pneg %p209
        $region62: #{encoder_layer.3} parent=47 // pred_check_branch
          %666 = sbr.rel (%p664) target = $region64
        $region63: #{encoder_layer.3} parent=47 // pred_region
          _
        $region64: #{encoder_layer.3} parent=47 // pred_fallthru
          _
        // Predicated region
        $region65: #{encoder_layer.3} parent=47 // pred_check
          %p667 = pneg %p237
        $region66: #{encoder_layer.3} parent=47 // pred_check_branch
          %669 = sbr.rel (%p667) target = $region68
        $region67: #{encoder_layer.3} parent=47 // pred_region
          _
        $region68: #{encoder_layer.3} parent=47 // pred_fallthru
          _
        // Predicated region
        $region69: #{encoder_layer.3} parent=47 // pred_check
          %p670 = pneg %p265
        $region70: #{encoder_layer.3} parent=47 // pred_check_branch
          %672 = sbr.rel (%p670) target = $region72
        $region71: #{encoder_layer.3} parent=47 // pred_region
          _
        $region72: #{encoder_layer.3} parent=47 // pred_fallthru
          _
      $region48: #{encoder_layer.3} parent=5 // pred_fallthru
        _
      %p673 = scmp.le.s32.totalorder 2, %s18
      // Predicated region
      $region73: #{encoder_layer.3} parent=5 // pred_check
        %p674 = pneg %p673
      $region74: #{encoder_layer.3} parent=5 // pred_check_branch
        %676 = sbr.rel (%p674) target = $region76
      $region75: #{encoder_layer.3} parent=5 // pred_region
        %s677 = ssub.s32 %s18, 2
        // Predicated region
        $region77: #{encoder_layer.3} parent=75 // pred_check
          %p678 = pneg %p215
        $region78: #{encoder_layer.3} parent=75 // pred_check_branch
          %680 = sbr.rel (%p678) target = $region80
        $region79: #{encoder_layer.3} parent=75 // pred_region
          %p681 = scmp.lt.s32.totalorder %s29, 1
          %s682 = scalar_select %p681, %s29, 1
          %p683 = scmp.lt.s32.totalorder %s30, 0
          %s684 = scalar_select %p683, %s30, 0
          %s685 = sadd.s32 %s684, %s682
          %s686 = smul.addr %s685, 4
          %s687 = scalar_lea.vmem %s7, %s686
        $region80: #{encoder_layer.3} parent=75 // pred_fallthru
          _
        // Predicated region
        $region81: #{encoder_layer.3} parent=75 // pred_check
          %p688 = pneg %p243
        $region82: #{encoder_layer.3} parent=75 // pred_check_branch
          %690 = sbr.rel (%p688) target = $region84
        $region83: #{encoder_layer.3} parent=75 // pred_region
          %p691 = scmp.lt.s32.totalorder %s29, 1
          %s692 = scalar_select %p691, %s29, 1
          %p693 = scmp.lt.s32.totalorder %s30, 0
          %s694 = scalar_select %p693, %s30, 0
          %s695 = sadd.s32 %s694, %s692
          %s696 = smul.addr %s695, 4
          %s697 = scalar_lea.vmem %s8, %s696
        $region84: #{encoder_layer.3} parent=75 // pred_fallthru
          _
        // Predicated region
        $region85: #{encoder_layer.3} parent=75 // pred_check
          %p698 = pneg %p271
        $region86: #{encoder_layer.3} parent=75 // pred_check_branch
          %700 = sbr.rel (%p698) target = $region88
        $region87: #{encoder_layer.3} parent=75 // pred_region
          %p701 = scmp.lt.s32.totalorder %s29, 1
          %s702 = scalar_select %p701, %s29, 1
          %p703 = scmp.lt.s32.totalorder %s30, 0
          %s704 = scalar_select %p703, %s30, 0
          %s705 = sadd.s32 %s704, %s702
          %s706 = smul.addr %s705, 4
          %s707 = scalar_lea.vmem %s9, %s706
        $region88: #{encoder_layer.3} parent=75 // pred_fallthru
          _
      $region76: #{encoder_layer.3} parent=5 // pred_fallthru
        _
    $region6: #{encoder_layer.3} parent=1 // loop_footer
      %s22 = sadd.s32 1, %s18
    $region7: #{encoder_layer.3} parent=1 // loop_footer_branch
      %17 = sbr.rel target = $region3
    $region8: #{encoder_layer.3} parent=1 // loop_exit
      _
    %708 = vsyncpa [#allocation3], 1
    %s709 = scalar_lea.sflag [#allocation3], 1
    %710 = vsyncpa %s709, 1
    %711 = vsyncpa [#allocation5], 1

// kernel: encoder_layer.4
$region0: #{encoder_layer.4}
  #allocation0 [shape = 'u32[]', space=smem, size = 0x4, offset = 0x4, fixed_abs, tag = 'smem constant byte address 0x4 - core index']
  #allocation1 [shape = 'u32[144,128]{1,0:T(1,128)}', space=vmem, size = 0x12000, scoped, tag = 'internal scratch']
  #allocation2 [shape = 'f32[8,1]{1,0:T(8,128)}', space=vmem, size = 0x1000, scoped, tag = 'scratch operand']
  #allocation3 [shape = 'f32[8,1]{1,0:T(8,128)}', space=vmem, size = 0x1000, scoped, tag = 'scratch operand']
  #allocation4 [shape = 'f32[8,8]{1,0:T(8,128)}', space=vmem, size = 0x1000, scoped, tag = 'scratch operand']
  %s0 = inlined_call_operand.vmem [shape: bf16[8,8,8], index: 0, kind: input, shape index: {}]
  %s1 = inlined_call_operand.vmem [shape: bf16[8,8,8], index: 1, kind: input, shape index: {}]
  %s2 = inlined_call_operand.vmem [shape: bf16[8,8,8], index: 2, kind: input, shape index: {}]
  %s3 = inlined_call_operand.vmem [shape: bf16[8,8,8], index: 3, kind: output, shape index: {}]
  %s4 = sld [smem:[#allocation0]]
  $region53: #{encoder_layer.4} parent=0
    _
  %s6 = ssub.s32 1, %s4
  %s7 = scalar_select 0, %s6, %s4
  loop: start=0, step=1, limit=10
  $region2: #{encoder_layer.4} parent=0 // loop_pre_header
    _
  $region3: #{encoder_layer.4} parent=0 // loop_header
    %s9 = sphi 0, %s13
    %p10 = scmp.ge.s32.totalorder %s9, 10
    %s16 = sphi 0, %s35
    %s17 = sphi 0, %s31
    %s18 = sphi 0, %s27
    %s19 = sphi 0, %s16
    %s20 = sphi 0, %s17
    %s21 = sphi 0, %s18
    %s22 = sphi 0, %s19
    %s23 = sphi 0, %s20
    %s24 = sphi 0, %s21
    %s40 = sphi 0, %s42
    %s43 = sphi 0, %s40
    %s44 = sphi 0, %s43
    %s60 = sphi 0, %s44
    %s68 = sphi 0, %s70
    %s71 = sphi 0, %s68
    %s72 = sphi 0, %s71
    %s88 = sphi 0, %s72
    %s96 = sphi 0, %s98
    %s99 = sphi 0, %s96
    %s100 = sphi 0, %s99
    %s116 = sphi 0, %s100
    %s124 = sphi 0, %s126
    %s127 = sphi 0, %s124
    %s128 = sphi 0, %s127
    %s144 = sphi 0, %s128
  $region4: #{encoder_layer.4} parent=0 // loop_header_branch
    %12 = sbr.rel (%p10) target = $region8
  $region5: #{encoder_layer.4} parent=0 // loop_body
    %s14 = ssub.s32 %s9, 1
    %s15 = ssub.s32 %s9, 2
    %s25 = sadd.s32 1, %s18
    %p26 = scmp.ge.s32.totalorder %s25, 1
    %s27 = scalar_select %p26, 0, %s25
    %s28 = sadd.s32 1, %s17
    %s29 = scalar_select %p26, %s28, %s17
    %p30 = scmp.ge.s32.totalorder %s29, 1
    %s31 = scalar_select %p30, 0, %s29
    %s32 = sadd.s32 1, %s16
    %s33 = scalar_select %p30, %s32, %s16
    %p34 = scmp.ge.s32.totalorder %s33, 8
    %s35 = scalar_select %p34, 0, %s33
    %s36 = ssub.s32 %s16, %s35
    %s37 = ssub.s32 %s17, %s31
    %s38 = sor.u32 %s36, %s37
    %p39 = scmp.eq.s32.totalorder %s38, 0
    %s41 = sadd.s32 %s40, 1
    %s42 = scalar_select %p39, %s40, %s41
    %p45 = pneg %p39
    %p46 = scmp.eq.s32.totalorder %s9, 7
    %p47 = por %p45, %p46
    %p48 = scmp.ne.s32.totalorder %s40, %s43
    %p49 = scmp.eq.s32.totalorder %s9, 0
    %p50 = por %p48, %p49
    %p51 = scmp.ne.s32.totalorder %s40, %s43
    %p52 = scmp.eq.s32.totalorder %s14, 7
    %p53 = por %p51, %p52
    %p54 = scmp.ne.s32.totalorder %s43, %s44
    %p55 = scmp.eq.s32.totalorder %s14, 0
    %p56 = por %p54, %p55
    %p57 = scmp.ne.s32.totalorder %s43, %s44
    %p58 = scmp.eq.s32.totalorder %s15, 7
    %p59 = por %p57, %p58
    %p61 = scmp.ne.s32.totalorder %s44, %s60
    %p62 = scmp.eq.s32.totalorder %s15, 0
    %p63 = por %p61, %p62
    %s64 = ssub.s32 %s16, %s35
    %s65 = ssub.s32 %s18, %s27
    %s66 = sor.u32 %s64, %s65
    %p67 = scmp.eq.s32.totalorder %s66, 0
    %s69 = sadd.s32 %s68, 1
    %s70 = scalar_select %p67, %s68, %s69
    %p73 = pneg %p67
    %p74 = scmp.eq.s32.totalorder %s9, 7
    %p75 = por %p73, %p74
    %p76 = scmp.ne.s32.totalorder %s68, %s71
    %p77 = scmp.eq.s32.totalorder %s9, 0
    %p78 = por %p76, %p77
    %p79 = scmp.ne.s32.totalorder %s68, %s71
    %p80 = scmp.eq.s32.totalorder %s14, 7
    %p81 = por %p79, %p80
    %p82 = scmp.ne.s32.totalorder %s71, %s72
    %p83 = scmp.eq.s32.totalorder %s14, 0
    %p84 = por %p82, %p83
    %p85 = scmp.ne.s32.totalorder %s71, %s72
    %p86 = scmp.eq.s32.totalorder %s15, 7
    %p87 = por %p85, %p86
    %p89 = scmp.ne.s32.totalorder %s72, %s88
    %p90 = scmp.eq.s32.totalorder %s15, 0
    %p91 = por %p89, %p90
    %s92 = ssub.s32 %s16, %s35
    %s93 = ssub.s32 %s18, %s27
    %s94 = sor.u32 %s92, %s93
    %p95 = scmp.eq.s32.totalorder %s94, 0
    %s97 = sadd.s32 %s96, 1
    %s98 = scalar_select %p95, %s96, %s97
    %p101 = pneg %p95
    %p102 = scmp.eq.s32.totalorder %s9, 7
    %p103 = por %p101, %p102
    %p104 = scmp.ne.s32.totalorder %s96, %s99
    %p105 = scmp.eq.s32.totalorder %s9, 0
    %p106 = por %p104, %p105
    %p107 = scmp.ne.s32.totalorder %s96, %s99
    %p108 = scmp.eq.s32.totalorder %s14, 7
    %p109 = por %p107, %p108
    %p110 = scmp.ne.s32.totalorder %s99, %s100
    %p111 = scmp.eq.s32.totalorder %s14, 0
    %p112 = por %p110, %p111
    %p113 = scmp.ne.s32.totalorder %s99, %s100
    %p114 = scmp.eq.s32.totalorder %s15, 7
    %p115 = por %p113, %p114
    %p117 = scmp.ne.s32.totalorder %s100, %s116
    %p118 = scmp.eq.s32.totalorder %s15, 0
    %p119 = por %p117, %p118
    %s120 = ssub.s32 %s16, %s35
    %s121 = ssub.s32 %s17, %s31
    %s122 = sor.u32 %s120, %s121
    %p123 = scmp.eq.s32.totalorder %s122, 0
    %s125 = sadd.s32 %s124, 1
    %s126 = scalar_select %p123, %s124, %s125
    %p129 = pneg %p123
    %p130 = scmp.eq.s32.totalorder %s9, 7
    %p131 = por %p129, %p130
    %p132 = scmp.ne.s32.totalorder %s124, %s127
    %p133 = scmp.eq.s32.totalorder %s9, 0
    %p134 = por %p132, %p133
    %p135 = scmp.ne.s32.totalorder %s124, %s127
    %p136 = scmp.eq.s32.totalorder %s14, 7
    %p137 = por %p135, %p136
    %p138 = scmp.ne.s32.totalorder %s127, %s128
    %p139 = scmp.eq.s32.totalorder %s14, 0
    %p140 = por %p138, %p139
    %p141 = scmp.ne.s32.totalorder %s127, %s128
    %p142 = scmp.eq.s32.totalorder %s15, 7
    %p143 = por %p141, %p142
    %p145 = scmp.ne.s32.totalorder %s128, %s144
    %p146 = scmp.eq.s32.totalorder %s15, 0
    %p147 = por %p145, %p146
    %p148 = scmp.le.s32.totalorder 1, %s9
    %p149 = scmp.lt.s32.totalorder %s9, 9
    %p150 = pnand %p148, %p149
    %p151 = pneg %p150
    // Predicated region
    $region9: #{encoder_layer.4} parent=5 // pred_check
      _
    $region10: #{encoder_layer.4} parent=5 // pred_check_branch
      %153 = sbr.rel (%p150) target = $region12
    $region11: #{encoder_layer.4} parent=5 // pred_region
      %s154 = ssub.s32 %s9, 1
    $region12: #{encoder_layer.4} parent=5 // pred_fallthru
      _
    %p155 = scmp.lt.s32.totalorder %s9, 8
    // Predicated region
    $region13: #{encoder_layer.4} parent=5 // pred_check
      %p156 = pneg %p155
    $region14: #{encoder_layer.4} parent=5 // pred_check_branch
      %158 = sbr.rel (%p156) target = $region16
    $region15: #{encoder_layer.4} parent=5 // pred_region
      // Predicated region
      $region17: #{encoder_layer.4} parent=15 // pred_check
        %p159 = pneg %p50
      $region18: #{encoder_layer.4} parent=15 // pred_check_branch
        %161 = sbr.rel (%p159) target = $region20
      $region19: #{encoder_layer.4} parent=15 // pred_region
        %p162 = scmp.lt.s32.totalorder %s16, 7
        %s163 = scalar_select %p162, %s16, 7
        %p164 = scmp.lt.s32.totalorder %s17, 0
        %s165 = scalar_select %p164, %s17, 0
        %s166 = sadd.s32 %s165, %s163
        %s167 = smul.addr %s166, 4
        %s168 = scalar_lea.vmem %s0, %s167
      $region20: #{encoder_layer.4} parent=15 // pred_fallthru
        _
      // Predicated region
      $region21: #{encoder_layer.4} parent=15 // pred_check
        %p169 = pneg %p78
      $region22: #{encoder_layer.4} parent=15 // pred_check_branch
        %171 = sbr.rel (%p169) target = $region24
      $region23: #{encoder_layer.4} parent=15 // pred_region
        %p172 = scmp.lt.s32.totalorder %s16, 7
        %s173 = scalar_select %p172, %s16, 7
        %p174 = scmp.lt.s32.totalorder %s18, 0
        %s175 = scalar_select %p174, %s18, 0
        %s176 = sadd.s32 %s175, %s173
        %s177 = smul.addr %s176, 4
        %s178 = scalar_lea.vmem %s1, %s177
      $region24: #{encoder_layer.4} parent=15 // pred_fallthru
        _
      // Predicated region
      $region25: #{encoder_layer.4} parent=15 // pred_check
        %p179 = pneg %p106
      $region26: #{encoder_layer.4} parent=15 // pred_check_branch
        %181 = sbr.rel (%p179) target = $region28
      $region27: #{encoder_layer.4} parent=15 // pred_region
        %p182 = scmp.lt.s32.totalorder %s16, 7
        %s183 = scalar_select %p182, %s16, 7
        %p184 = scmp.lt.s32.totalorder %s18, 0
        %s185 = scalar_select %p184, %s18, 0
        %s186 = sadd.s32 %s185, %s183
        %s187 = smul.addr %s186, 4
        %s188 = scalar_lea.vmem %s2, %s187
      $region28: #{encoder_layer.4} parent=15 // pred_fallthru
        _
    $region16: #{encoder_layer.4} parent=5 // pred_fallthru
      _
    %p189 = scmp.le.s32.totalorder 1, %s9
    %p190 = scmp.lt.s32.totalorder %s9, 9
    %p191 = pnand %p189, %p190
    %p192 = pneg %p191
    // Predicated region
    $region29: #{encoder_layer.4} parent=5 // pred_check
      _
    $region30: #{encoder_layer.4} parent=5 // pred_check_branch
      %194 = sbr.rel (%p191) target = $region32
    $region31: #{encoder_layer.4} parent=5 // pred_region
      %s195 = ssub.s32 %s9, 1
      %p196 = scmp.lt.s32.totalorder %s19, 7
      %s197 = scalar_select %p196, %s19, 7
      %p198 = scmp.lt.s32.totalorder %s20, 0
      %s199 = scalar_select %p198, %s20, 0
      %s200 = sadd.s32 %s199, %s197
      %s201 = smul.addr %s200, 4
      %s202 = scalar_lea.vmem %s0, %s201
      %p203 = pneg %p56
      %p204 = pneg %p53
      %p205 = scmp.lt.s32.totalorder %s19, 7
      %s206 = scalar_select %p205, %s19, 7
      %p207 = scmp.lt.s32.totalorder %s21, 0
      %s208 = scalar_select %p207, %s21, 0
      %s209 = sadd.s32 %s208, %s206
      %s210 = smul.addr %s209, 4
      %s211 = scalar_lea.vmem %s1, %s210
      %p212 = pneg %p84
      %p213 = pneg %p81
      %p214 = scmp.lt.s32.totalorder %s19, 7
      %s215 = scalar_select %p214, %s19, 7
      %p216 = scmp.lt.s32.totalorder %s21, 0
      %s217 = scalar_select %p216, %s21, 0
      %s218 = sadd.s32 %s217, %s215
      %s219 = smul.addr %s218, 4
      %s220 = scalar_lea.vmem %s2, %s219
      %p221 = pneg %p112
      %p222 = pneg %p109
      %p223 = pneg %p140
      %p224 = pneg %p137
      %p225 = scmp.lt.s32.totalorder %s19, 7
      %s226 = scalar_select %p225, %s19, 7
      %p227 = scmp.lt.s32.totalorder %s20, 0
      %s228 = scalar_select %p227, %s20, 0
      %s229 = sadd.s32 %s228, %s226
      %s230 = smul.addr %s229, 4
      %s231 = scalar_lea.vmem %s3, %s230
      %p232 = scmp.lt.s32.totalorder %s19, 7
      %s233 = scalar_select %p232, %s19, 7
      %p234 = scmp.lt.s32.totalorder %s20, 0
      %s235 = scalar_select %p234, %s20, 0
      %s236 = sadd.s32 %s235, %s233
      %s237 = smul.addr %s236, 4
      %s238 = scalar_lea.vmem %s0, %s237
      %p239 = scmp.lt.s32.totalorder %s19, 7
      %s240 = scalar_select %p239, %s19, 7
      %p241 = scmp.lt.s32.totalorder %s21, 0
      %s242 = scalar_select %p241, %s21, 0
      %s243 = sadd.s32 %s242, %s240
      %s244 = smul.addr %s243, 4
      %s245 = scalar_lea.vmem %s1, %s244
      %p246 = scmp.lt.s32.totalorder %s19, 7
      %s247 = scalar_select %p246, %s19, 7
      %p248 = scmp.lt.s32.totalorder %s21, 0
      %s249 = scalar_select %p248, %s21, 0
      %s250 = sadd.s32 %s249, %s247
      %s251 = smul.addr %s250, 4
      %s252 = scalar_lea.vmem %s2, %s251
      %p253 = scmp.lt.s32.totalorder %s19, 7
      %s254 = scalar_select %p253, %s19, 7
      %p255 = scmp.lt.s32.totalorder %s20, 0
      %s256 = scalar_select %p255, %s20, 0
      %s257 = sadd.s32 %s256, %s254
      %s258 = smul.addr %s257, 4
      %s259 = scalar_lea.vmem %s3, %s258
      %p261 = scmp.eq.s32.totalorder %s21, 0
      // Predicated region
      $region33: #{encoder_layer.4} parent=31 // pred_check
        %p262 = pneg %p261
      $region34: #{encoder_layer.4} parent=31 // pred_check_branch
        %264 = sbr.rel (%p262) target = $region36
      $region35: #{encoder_layer.4} parent=31 // pred_region
        %vm265 = vcmask 7168
        %266 = vst.msk [vmem:[#allocation2] sm:$0xff] %vm265, -inf
        %267 = vst.msk [vmem:[#allocation3] sm:$0xff] %vm265, 0.0
        %vm268 = vcmask 64512
        %269 = vst.msk [vmem:[#allocation4] sm:$0xff] %vm268, 0.0
      $region36: #{encoder_layer.4} parent=31 // pred_fallthru
        _
      %v270 = vld [vmem:[%s238] sm:$0xf]
      %v271 = vld [vmem:[%s245] sm:$0xf]
      %vm272 = vcmask 64512
      %v274 = vsel %vm272, %v270, 0
      %v277 = vsel %vm272, %v271, 0
      %279 = vmatprep.subr.bf16.mxu0 0
      %280 = vmatpush1.bf16.xpose.msra.mxu0 0
      %281 = vmatprep.subr.bf16.mxu0 0
      %282 = vmatpush1.bf16.xpose.msra.mxu0 0
      %283 = vmatprep.subr.bf16.mxu0 0
      %284 = vmatpush1.bf16.xpose.msra.mxu0 0
      %285 = vmatprep.subr.bf16.mxu0 0
      %286 = vmatpush1.bf16.xpose.msra.mxu0 0
      %287 = vmatprep.subr.bf16.mxu0 0
      %288 = vmatpush1.bf16.xpose.msra.mxu0 0
      %289 = vmatprep.subr.bf16.mxu0 0
      %290 = vmatpush1.bf16.xpose.msra.mxu0 0
      %291 = vmatprep.subr.bf16.mxu0 0
      %292 = vmatpush1.bf16.xpose.msra.mxu0 0
      %293 = vmatprep.subr.bf16.mxu0 0
      %294 = vmatpush1.bf16.xpose.msra.mxu0 %v277
      %295 = vmatprep.subr.bf16.mxu0 0
      %296 = vmatpush2.bf16.xpose.msra.mxu0 0
      %297 = vmatprep.subr.bf16.mxu0 0
      %298 = vmatpush2.bf16.xpose.msra.mxu0 0
      %299 = vmatprep.subr.bf16.mxu0 0
      %300 = vmatpush2.bf16.xpose.msra.mxu0 0
      %301 = vmatprep.subr.bf16.mxu0 0
      %302 = vmatpush2.bf16.xpose.msra.mxu0 0
      %303 = vmatprep.subr.bf16.mxu0 0
      %304 = vmatpush2.bf16.xpose.msra.mxu0 0
      %305 = vmatprep.subr.bf16.mxu0 0
      %306 = vmatpush2.bf16.xpose.msra.mxu0 0
      %307 = vmatprep.subr.bf16.mxu0 0
      %308 = vmatpush2.bf16.xpose.msra.mxu0 0
      %309 = vmatprep.subr.bf16.mxu0 0
      %310 = vmatpush2.bf16.xpose.msra.mxu0 0
      %311 = vmatprep.mubr.bf16.mxu0 0
      %312 = vmatmul.mubr.bf16.gmra.mxu0 %v274
      %v313 = vpop.f32.mrf.mxu0
      %v314 = vadd.f32 0.0, %v313
      %v315 = vpop.f32.mrf.mxu0
      %v316 = vpop.f32.mrf.mxu0
      %v317 = vpop.f32.mrf.mxu0
      %318 = vdwg.mxu0
      %v319 = vld [vmem:[#allocation2] sm:$0xff]
      %v320 = vsel %vm272, %v314, -inf
      %321 = vmax.xlane.f32.xlu0 %v320
      %v322 = vpop.xlane.xlu0 %321
      %v323 = vmax.f32 %v319, %v322
      %v324 = vsub.f32 %v319, %v323
      %v325 = vmul.f32 %v324, 1.442695
      %v326 = vpow.pop %v325
      %328 = vset.pattern.permute.xlu0 0
      %329 = vperm.xlu0 %328, %v323
      %v330 = vpop.permute.xlu0 %329
      %v332 = vsub.f32 %v314, %v330
      %v333 = vmul.f32 %v332, 1.442695
      %v334 = vpow.pop %v333
      %v335 = vld [vmem:[#allocation3] sm:$0xff]
      %v336 = vmul.f32 %v326, %v335
      %v337 = vsel %vm272, %v334, 0.0
      %338 = vadd.xlane.f32.xlu0 %v337
      %v339 = vpop.xlane.xlu0 %338
      %v340 = vadd.f32 %v336, %v339
      %vm341 = vcmask 7168
      %342 = vst.msk [vmem:[#allocation3] sm:$0xff] %vm341, %v340
      %v343 = vld [vmem:[#allocation4] sm:$0xff]
      %345 = vset.pattern.permute.xlu0 0
      %346 = vperm.xlu0 %345, %v326
      %v347 = vpop.permute.xlu0 %346
      %v349 = vmul.f32 %v347, %v343
      %v350 = vpack.c.bf16 %v334, %v334
      %v351 = vld [vmem:[%s252] sm:$0xf]
      %v353 = vsel %vm272, %v350, 0
      %vm355 = vcmask 1043456
      %v357 = vsel %vm355, %v351, 0
      %359 = vmatprep.subr.bf16.mxu0 0
      %360 = vmatpush1.bf16.msra.mxu0 0
      %361 = vmatprep.subr.bf16.mxu0 0
      %362 = vmatpush1.bf16.msra.mxu0 0
      %363 = vmatprep.subr.bf16.mxu0 0
      %364 = vmatpush1.bf16.msra.mxu0 0
      %365 = vmatprep.subr.bf16.mxu0 0
      %366 = vmatpush1.bf16.msra.mxu0 0
      %367 = vmatprep.subr.bf16.mxu0 0
      %368 = vmatpush1.bf16.msra.mxu0 0
      %369 = vmatprep.subr.bf16.mxu0 0
      %370 = vmatpush1.bf16.msra.mxu0 0
      %371 = vmatprep.subr.bf16.mxu0 0
      %372 = vmatpush1.bf16.msra.mxu0 0
      %373 = vmatprep.subr.bf16.mxu0 0
      %374 = vmatpush1.bf16.msra.mxu0 %v357
      %375 = vmatprep.subr.bf16.mxu0 0
      %376 = vmatpush2.bf16.msra.mxu0 0
      %377 = vmatprep.subr.bf16.mxu0 0
      %378 = vmatpush2.bf16.msra.mxu0 0
      %379 = vmatprep.subr.bf16.mxu0 0
      %380 = vmatpush2.bf16.msra.mxu0 0
      %381 = vmatprep.subr.bf16.mxu0 0
      %382 = vmatpush2.bf16.msra.mxu0 0
      %383 = vmatprep.subr.bf16.mxu0 0
      %384 = vmatpush2.bf16.msra.mxu0 0
      %385 = vmatprep.subr.bf16.mxu0 0
      %386 = vmatpush2.bf16.msra.mxu0 0
      %387 = vmatprep.subr.bf16.mxu0 0
      %388 = vmatpush2.bf16.msra.mxu0 0
      %389 = vmatprep.subr.bf16.mxu0 0
      %390 = vmatpush2.bf16.msra.mxu0 0
      %391 = vmatprep.mubr.bf16.mxu0 0
      %392 = vmatmul.mubr.bf16.gmra.mxu0 %v353
      %v393 = vpop.f32.mrf.mxu0
      %v394 = vadd.f32 0.0, %v393
      %v395 = vpop.f32.mrf.mxu0
      %v396 = vpop.f32.mrf.mxu0
      %v397 = vpop.f32.mrf.mxu0
      %398 = vdwg.mxu0
      %v399 = vadd.f32 %v349, %v394
      %400 = vst.msk [vmem:[#allocation4] sm:$0xff] %vm272, %v399
      %401 = vst.msk [vmem:[#allocation2] sm:$0xff] %vm341, %v323
      // Predicated region
      $region37: #{encoder_layer.4} parent=31 // pred_check
        %p402 = pneg %p261
      $region38: #{encoder_layer.4} parent=31 // pred_check_branch
        %404 = sbr.rel (%p402) target = $region40
      $region39: #{encoder_layer.4} parent=31 // pred_region
        %v405 = vld [vmem:[#allocation4] sm:$0xff]
        %v406 = vld [vmem:[#allocation3] sm:$0xff]
        %v407 = vrcp.pop %v406
        %409 = vset.pattern.permute.xlu0 0
        %410 = vperm.xlu0 %409, %v407
        %v411 = vpop.permute.xlu0 %410
        %v413 = vmul.f32 %v405, %v411
        %v414 = vpack.c.bf16 %v413, %v413
        %vm415 = vcmask 60416
        %416 = vst.msk [vmem:[%s259] sm:$0xf] %vm415, %v414
      $region40: #{encoder_layer.4} parent=31 // pred_fallthru
        _
      %p417 = scmp.lt.s32.totalorder %s19, 7
      %s418 = scalar_select %p417, %s19, 7
      %p419 = scmp.lt.s32.totalorder %s20, 0
      %s420 = scalar_select %p419, %s20, 0
      %s421 = sadd.s32 %s420, %s418
      %s422 = smul.addr %s421, 4
      %s423 = scalar_lea.vmem %s3, %s422
      // Predicated region
      $region41: #{encoder_layer.4} parent=31 // pred_check
        %p424 = pneg %p137
      $region42: #{encoder_layer.4} parent=31 // pred_check_branch
        %426 = sbr.rel (%p424) target = $region44
      $region43: #{encoder_layer.4} parent=31 // pred_region
        _
      $region44: #{encoder_layer.4} parent=31 // pred_fallthru
        _
    $region32: #{encoder_layer.4} parent=5 // pred_fallthru
      _
    %p427 = scmp.le.s32.totalorder 2, %s9
    // Predicated region
    $region45: #{encoder_layer.4} parent=5 // pred_check
      %p428 = pneg %p427
    $region46: #{encoder_layer.4} parent=5 // pred_check_branch
      %430 = sbr.rel (%p428) target = $region48
    $region47: #{encoder_layer.4} parent=5 // pred_region
      %s431 = ssub.s32 %s9, 2
      // Predicated region
      $region49: #{encoder_layer.4} parent=47 // pred_check
        %p432 = pneg %p143
      $region50: #{encoder_layer.4} parent=47 // pred_check_branch
        %434 = sbr.rel (%p432) target = $region52
      $region51: #{encoder_layer.4} parent=47 // pred_region
        %p435 = scmp.lt.s32.totalorder %s22, 7
        %s436 = scalar_select %p435, %s22, 7
        %p437 = scmp.lt.s32.totalorder %s23, 0
        %s438 = scalar_select %p437, %s23, 0
        %s439 = sadd.s32 %s438, %s436
        %s440 = smul.addr %s439, 4
        %s441 = scalar_lea.vmem %s3, %s440
      $region52: #{encoder_layer.4} parent=47 // pred_fallthru
        _
    $region48: #{encoder_layer.4} parent=5 // pred_fallthru
      _
  $region6: #{encoder_layer.4} parent=0 // loop_footer
    %s13 = sadd.s32 1, %s9
  $region7: #{encoder_layer.4} parent=0 // loop_footer_branch
    %8 = sbr.rel target = $region3
  $region8: #{encoder_layer.4} parent=0 // loop_exit
    _

// kernel: encoder_layer.5
$region0: #{encoder_layer.5}
  #allocation0 [shape = 'u32[]', space=smem, size = 0x4, offset = 0x4, fixed_abs, tag = 'smem constant byte address 0x4 - core index']
  #allocation1 [shape = 'u32[144,128]{1,0:T(1,128)}', space=vmem, size = 0x12000, scoped, tag = 'internal scratch']
  #allocation2 [shape = 'f32[8,32]{1,0:T(8,128)}', space=vmem, size = 0x1000, scoped, tag = 'scratch operand']
  #allocation3 [shape = 'f32[8,32]{1,0:T(8,128)}', space=vmem, size = 0x1000, scoped, tag = 'scratch operand']
  %s0 = inlined_call_operand.vmem [shape: bf16[2,8,32], index: 0, kind: input, shape index: {}]
  %s1 = inlined_call_operand.vmem [shape: f32[2,8,32], index: 1, kind: input, shape index: {}]
  %s2 = inlined_call_operand.vmem [shape: bf16[32,32], index: 2, kind: input, shape index: {}]
  %s3 = inlined_call_operand.vmem [shape: f32[1,32], index: 3, kind: input, shape index: {}]
  %s4 = inlined_call_operand.vmem [shape: f32[1,32], index: 4, kind: input, shape index: {}]
  %s5 = inlined_call_operand.vmem [shape: f32[1,32], index: 5, kind: input, shape index: {}]
  %s6 = inlined_call_operand.vmem [shape: bf16[32,64], index: 6, kind: input, shape index: {}]
  %s7 = inlined_call_operand.vmem [shape: f32[1,64], index: 7, kind: input, shape index: {}]
  %s8 = inlined_call_operand.vmem [shape: bf16[64,32], index: 8, kind: input, shape index: {}]
  %s9 = inlined_call_operand.vmem [shape: f32[1,32], index: 9, kind: input, shape index: {}]
  %s10 = inlined_call_operand.vmem [shape: f32[1,32], index: 10, kind: input, shape index: {}]
  %s11 = inlined_call_operand.vmem [shape: f32[1,32], index: 11, kind: input, shape index: {}]
  %s12 = inlined_call_operand.hbm [shape: f32[2,8,32], index: 12, kind: output, shape index: {}]
  %s13 = sld [smem:[#allocation0]]
  $region89: #{encoder_layer.5} parent=0
    _
  %s15 = ssub.s32 1, %s13
  %s16 = scalar_select 0, %s15, %s13
  $region1: #{encoder_layer.5} parent=0
    #allocation4 [shape = 'u8[8192]{0}', space=vmem, size = 0x2000, scoped, tag = 'output window, operand 0']
    #allocation5 [shape = 's32[2]{0}', space=sflag, size = 0x8, scoped, tag = 'scoped memory for encoder_layer.5']
    %17 = vsyncpa [#allocation5], 0
    %s18 = scalar_lea.sflag [#allocation5], 1
    %19 = vsyncpa %s18, 0
    loop: start=0, step=1, limit=4
    $region2: #{encoder_layer.5} parent=1 // loop_pre_header
      _
    $region3: #{encoder_layer.5} parent=1 // loop_header
      %s21 = sphi 0, %s25
      %p22 = scmp.ge.s32.totalorder %s21, 4
      %s28 = sphi 0, %s47
      %s29 = sphi 0, %s43
      %s30 = sphi 0, %s39
      %s31 = sphi 0, %s28
      %s32 = sphi 0, %s29
      %s33 = sphi 0, %s30
      %s34 = sphi 0, %s31
      %s35 = sphi 0, %s32
      %s36 = sphi 0, %s33
      %s52 = sphi 0, %s54
      %s55 = sphi 0, %s52
      %s56 = sphi 0, %s55
      %s72 = sphi 0, %s56
      %s80 = sphi 0, %s82
      %s83 = sphi 0, %s80
      %s84 = sphi 0, %s83
      %s100 = sphi 0, %s84
      %s104 = sphi 0, %s104
      %s106 = sphi 0, %s104
      %s107 = sphi 0, %s106
      %s121 = sphi 0, %s107
      %s125 = sphi 0, %s125
      %s127 = sphi 0, %s125
      %s128 = sphi 0, %s127
      %s142 = sphi 0, %s128
      %s146 = sphi 0, %s146
      %s148 = sphi 0, %s146
      %s149 = sphi 0, %s148
      %s163 = sphi 0, %s149
      %s167 = sphi 0, %s167
      %s169 = sphi 0, %s167
      %s170 = sphi 0, %s169
      %s184 = sphi 0, %s170
      %s190 = sphi 0, %s192
      %s193 = sphi 0, %s190
      %s194 = sphi 0, %s193
      %s210 = sphi 0, %s194
      %s216 = sphi 0, %s218
      %s219 = sphi 0, %s216
      %s220 = sphi 0, %s219
      %s236 = sphi 0, %s220
      %s242 = sphi 0, %s244
      %s245 = sphi 0, %s242
      %s246 = sphi 0, %s245
      %s262 = sphi 0, %s246
      %s266 = sphi 0, %s266
      %s268 = sphi 0, %s266
      %s269 = sphi 0, %s268
      %s283 = sphi 0, %s269
      %s287 = sphi 0, %s287
      %s289 = sphi 0, %s287
      %s290 = sphi 0, %s289
      %s304 = sphi 0, %s290
      %s308 = sphi 0, %s308
      %s310 = sphi 0, %s308
      %s311 = sphi 0, %s310
      %s325 = sphi 0, %s311
      %s333 = sphi 0, %s335
      %s336 = sphi 0, %s333
      %s337 = sphi 0, %s336
      %s353 = sphi 0, %s337
    $region4: #{encoder_layer.5} parent=1 // loop_header_branch
      %24 = sbr.rel (%p22) target = $region8
    $region5: #{encoder_layer.5} parent=1 // loop_body
      %s26 = ssub.s32 %s21, 1
      %s27 = ssub.s32 %s21, 2
      %s37 = sadd.s32 1, %s30
      %p38 = scmp.ge.s32.totalorder %s37, 1
      %s39 = scalar_select %p38, 0, %s37
      %s40 = sadd.s32 1, %s29
      %s41 = scalar_select %p38, %s40, %s29
      %p42 = scmp.ge.s32.totalorder %s41, 1
      %s43 = scalar_select %p42, 0, %s41
      %s44 = sadd.s32 1, %s28
      %s45 = scalar_select %p42, %s44, %s28
      %p46 = scmp.ge.s32.totalorder %s45, 2
      %s47 = scalar_select %p46, 0, %s45
      %s48 = ssub.s32 %s28, %s47
      %s49 = ssub.s32 %s29, %s43
      %s50 = sor.u32 %s48, %s49
      %p51 = scmp.eq.s32.totalorder %s50, 0
      %s53 = sadd.s32 %s52, 1
      %s54 = scalar_select %p51, %s52, %s53
      %p57 = pneg %p51
      %p58 = scmp.eq.s32.totalorder %s21, 1
      %p59 = por %p57, %p58
      %p60 = scmp.ne.s32.totalorder %s52, %s55
      %p61 = scmp.eq.s32.totalorder %s21, 0
      %p62 = por %p60, %p61
      %p63 = scmp.ne.s32.totalorder %s52, %s55
      %p64 = scmp.eq.s32.totalorder %s26, 1
      %p65 = por %p63, %p64
      %p66 = scmp.ne.s32.totalorder %s55, %s56
      %p67 = scmp.eq.s32.totalorder %s26, 0
      %p68 = por %p66, %p67
      %p69 = scmp.ne.s32.totalorder %s55, %s56
      %p70 = scmp.eq.s32.totalorder %s27, 1
      %p71 = por %p69, %p70
      %p73 = scmp.ne.s32.totalorder %s56, %s72
      %p74 = scmp.eq.s32.totalorder %s27, 0
      %p75 = por %p73, %p74
      %s76 = ssub.s32 %s28, %s47
      %s77 = ssub.s32 %s29, %s43
      %s78 = sor.u32 %s76, %s77
      %p79 = scmp.eq.s32.totalorder %s78, 0
      %s81 = sadd.s32 %s80, 1
      %s82 = scalar_select %p79, %s80, %s81
      %p85 = pneg %p79
      %p86 = scmp.eq.s32.totalorder %s21, 1
      %p87 = por %p85, %p86
      %p88 = scmp.ne.s32.totalorder %s80, %s83
      %p89 = scmp.eq.s32.totalorder %s21, 0
      %p90 = por %p88, %p89
      %p91 = scmp.ne.s32.totalorder %s80, %s83
      %p92 = scmp.eq.s32.totalorder %s26, 1
      %p93 = por %p91, %p92
      %p94 = scmp.ne.s32.totalorder %s83, %s84
      %p95 = scmp.eq.s32.totalorder %s26, 0
      %p96 = por %p94, %p95
      %p97 = scmp.ne.s32.totalorder %s83, %s84
      %p98 = scmp.eq.s32.totalorder %s27, 1
      %p99 = por %p97, %p98
      %p101 = scmp.ne.s32.totalorder %s84, %s100
      %p102 = scmp.eq.s32.totalorder %s27, 0
      %p103 = por %p101, %p102
      %s105 = sadd.s32 %s104, 1
      %p108 = scmp.eq.s32.totalorder %s21, 1
      %p109 = scmp.ne.s32.totalorder %s104, %s106
      %p110 = scmp.eq.s32.totalorder %s21, 0
      %p111 = por %p109, %p110
      %p112 = scmp.ne.s32.totalorder %s104, %s106
      %p113 = scmp.eq.s32.totalorder %s26, 1
      %p114 = por %p112, %p113
      %p115 = scmp.ne.s32.totalorder %s106, %s107
      %p116 = scmp.eq.s32.totalorder %s26, 0
      %p117 = por %p115, %p116
      %p118 = scmp.ne.s32.totalorder %s106, %s107
      %p119 = scmp.eq.s32.totalorder %s27, 1
      %p120 = por %p118, %p119
      %p122 = scmp.ne.s32.totalorder %s107, %s121
      %p123 = scmp.eq.s32.totalorder %s27, 0
      %p124 = por %p122, %p123
      %s126 = sadd.s32 %s125, 1
      %p129 = scmp.eq.s32.totalorder %s21, 1
      %p130 = scmp.ne.s32.totalorder %s125, %s127
      %p131 = scmp.eq.s32.totalorder %s21, 0
      %p132 = por %p130, %p131
      %p133 = scmp.ne.s32.totalorder %s125, %s127
      %p134 = scmp.eq.s32.totalorder %s26, 1
      %p135 = por %p133, %p134
      %p136 = scmp.ne.s32.totalorder %s127, %s128
      %p137 = scmp.eq.s32.totalorder %s26, 0
      %p138 = por %p136, %p137
      %p139 = scmp.ne.s32.totalorder %s127, %s128
      %p140 = scmp.eq.s32.totalorder %s27, 1
      %p141 = por %p139, %p140
      %p143 = scmp.ne.s32.totalorder %s128, %s142
      %p144 = scmp.eq.s32.totalorder %s27, 0
      %p145 = por %p143, %p144
      %s147 = sadd.s32 %s146, 1
      %p150 = scmp.eq.s32.totalorder %s21, 1
      %p151 = scmp.ne.s32.totalorder %s146, %s148
      %p152 = scmp.eq.s32.totalorder %s21, 0
      %p153 = por %p151, %p152
      %p154 = scmp.ne.s32.totalorder %s146, %s148
      %p155 = scmp.eq.s32.totalorder %s26, 1
      %p156 = por %p154, %p155
      %p157 = scmp.ne.s32.totalorder %s148, %s149
      %p158 = scmp.eq.s32.totalorder %s26, 0
      %p159 = por %p157, %p158
      %p160 = scmp.ne.s32.totalorder %s148, %s149
      %p161 = scmp.eq.s32.totalorder %s27, 1
      %p162 = por %p160, %p161
      %p164 = scmp.ne.s32.totalorder %s149, %s163
      %p165 = scmp.eq.s32.totalorder %s27, 0
      %p166 = por %p164, %p165
      %s168 = sadd.s32 %s167, 1
      %p171 = scmp.eq.s32.totalorder %s21, 1
      %p172 = scmp.ne.s32.totalorder %s167, %s169
      %p173 = scmp.eq.s32.totalorder %s21, 0
      %p174 = por %p172, %p173
      %p175 = scmp.ne.s32.totalorder %s167, %s169
      %p176 = scmp.eq.s32.totalorder %s26, 1
      %p177 = por %p175, %p176
      %p178 = scmp.ne.s32.totalorder %s169, %s170
      %p179 = scmp.eq.s32.totalorder %s26, 0
      %p180 = por %p178, %p179
      %p181 = scmp.ne.s32.totalorder %s169, %s170
      %p182 = scmp.eq.s32.totalorder %s27, 1
      %p183 = por %p181, %p182
      %p185 = scmp.ne.s32.totalorder %s170, %s184
      %p186 = scmp.eq.s32.totalorder %s27, 0
      %p187 = por %p185, %p186
      %s188 = ssub.s32 %s30, %s39
      %p189 = scmp.eq.s32.totalorder %s188, 0
      %s191 = sadd.s32 %s190, 1
      %s192 = scalar_select %p189, %s190, %s191
      %p195 = pneg %p189
      %p196 = scmp.eq.s32.totalorder %s21, 1
      %p197 = por %p195, %p196
      %p198 = scmp.ne.s32.totalorder %s190, %s193
      %p199 = scmp.eq.s32.totalorder %s21, 0
      %p200 = por %p198, %p199
      %p201 = scmp.ne.s32.totalorder %s190, %s193
      %p202 = scmp.eq.s32.totalorder %s26, 1
      %p203 = por %p201, %p202
      %p204 = scmp.ne.s32.totalorder %s193, %s194
      %p205 = scmp.eq.s32.totalorder %s26, 0
      %p206 = por %p204, %p205
      %p207 = scmp.ne.s32.totalorder %s193, %s194
      %p208 = scmp.eq.s32.totalorder %s27, 1
      %p209 = por %p207, %p208
      %p211 = scmp.ne.s32.totalorder %s194, %s210
      %p212 = scmp.eq.s32.totalorder %s27, 0
      %p213 = por %p211, %p212
      %s214 = ssub.s32 %s30, %s39
      %p215 = scmp.eq.s32.totalorder %s214, 0
      %s217 = sadd.s32 %s216, 1
      %s218 = scalar_select %p215, %s216, %s217
      %p221 = pneg %p215
      %p222 = scmp.eq.s32.totalorder %s21, 1
      %p223 = por %p221, %p222
      %p224 = scmp.ne.s32.totalorder %s216, %s219
      %p225 = scmp.eq.s32.totalorder %s21, 0
      %p226 = por %p224, %p225
      %p227 = scmp.ne.s32.totalorder %s216, %s219
      %p228 = scmp.eq.s32.totalorder %s26, 1
      %p229 = por %p227, %p228
      %p230 = scmp.ne.s32.totalorder %s219, %s220
      %p231 = scmp.eq.s32.totalorder %s26, 0
      %p232 = por %p230, %p231
      %p233 = scmp.ne.s32.totalorder %s219, %s220
      %p234 = scmp.eq.s32.totalorder %s27, 1
      %p235 = por %p233, %p234
      %p237 = scmp.ne.s32.totalorder %s220, %s236
      %p238 = scmp.eq.s32.totalorder %s27, 0
      %p239 = por %p237, %p238
      %s240 = ssub.s32 %s30, %s39
      %p241 = scmp.eq.s32.totalorder %s240, 0
      %s243 = sadd.s32 %s242, 1
      %s244 = scalar_select %p241, %s242, %s243
      %p247 = pneg %p241
      %p248 = scmp.eq.s32.totalorder %s21, 1
      %p249 = por %p247, %p248
      %p250 = scmp.ne.s32.totalorder %s242, %s245
      %p251 = scmp.eq.s32.totalorder %s21, 0
      %p252 = por %p250, %p251
      %p253 = scmp.ne.s32.totalorder %s242, %s245
      %p254 = scmp.eq.s32.totalorder %s26, 1
      %p255 = por %p253, %p254
      %p256 = scmp.ne.s32.totalorder %s245, %s246
      %p257 = scmp.eq.s32.totalorder %s26, 0
      %p258 = por %p256, %p257
      %p259 = scmp.ne.s32.totalorder %s245, %s246
      %p260 = scmp.eq.s32.totalorder %s27, 1
      %p261 = por %p259, %p260
      %p263 = scmp.ne.s32.totalorder %s246, %s262
      %p264 = scmp.eq.s32.totalorder %s27, 0
      %p265 = por %p263, %p264
      %s267 = sadd.s32 %s266, 1
      %p270 = scmp.eq.s32.totalorder %s21, 1
      %p271 = scmp.ne.s32.totalorder %s266, %s268
      %p272 = scmp.eq.s32.totalorder %s21, 0
      %p273 = por %p271, %p272
      %p274 = scmp.ne.s32.totalorder %s266, %s268
      %p275 = scmp.eq.s32.totalorder %s26, 1
      %p276 = por %p274, %p275
      %p277 = scmp.ne.s32.totalorder %s268, %s269
      %p278 = scmp.eq.s32.totalorder %s26, 0
      %p279 = por %p277, %p278
      %p280 = scmp.ne.s32.totalorder %s268, %s269
      %p281 = scmp.eq.s32.totalorder %s27, 1
      %p282 = por %p280, %p281
      %p284 = scmp.ne.s32.totalorder %s269, %s283
      %p285 = scmp.eq.s32.totalorder %s27, 0
      %p286 = por %p284, %p285
      %s288 = sadd.s32 %s287, 1
      %p291 = scmp.eq.s32.totalorder %s21, 1
      %p292 = scmp.ne.s32.totalorder %s287, %s289
      %p293 = scmp.eq.s32.totalorder %s21, 0
      %p294 = por %p292, %p293
      %p295 = scmp.ne.s32.totalorder %s287, %s289
      %p296 = scmp.eq.s32.totalorder %s26, 1
      %p297 = por %p295, %p296
      %p298 = scmp.ne.s32.totalorder %s289, %s290
      %p299 = scmp.eq.s32.totalorder %s26, 0
      %p300 = por %p298, %p299
      %p301 = scmp.ne.s32.totalorder %s289, %s290
      %p302 = scmp.eq.s32.totalorder %s27, 1
      %p303 = por %p301, %p302
      %p305 = scmp.ne.s32.totalorder %s290, %s304
      %p306 = scmp.eq.s32.totalorder %s27, 0
      %p307 = por %p305, %p306
      %s309 = sadd.s32 %s308, 1
      %p312 = scmp.eq.s32.totalorder %s21, 1
      %p313 = scmp.ne.s32.totalorder %s308, %s310
      %p314 = scmp.eq.s32.totalorder %s21, 0
      %p315 = por %p313, %p314
      %p316 = scmp.ne.s32.totalorder %s308, %s310
      %p317 = scmp.eq.s32.totalorder %s26, 1
      %p318 = por %p316, %p317
      %p319 = scmp.ne.s32.totalorder %s310, %s311
      %p320 = scmp.eq.s32.totalorder %s26, 0
      %p321 = por %p319, %p320
      %p322 = scmp.ne.s32.totalorder %s310, %s311
      %p323 = scmp.eq.s32.totalorder %s27, 1
      %p324 = por %p322, %p323
      %p326 = scmp.ne.s32.totalorder %s311, %s325
      %p327 = scmp.eq.s32.totalorder %s27, 0
      %p328 = por %p326, %p327
      %s329 = ssub.s32 %s28, %s47
      %s330 = ssub.s32 %s29, %s43
      %s331 = sor.u32 %s329, %s330
      %p332 = scmp.eq.s32.totalorder %s331, 0
      %s334 = sadd.s32 %s333, 1
      %s335 = scalar_select %p332, %s333, %s334
      %p338 = pneg %p332
      %p339 = scmp.eq.s32.totalorder %s21, 1
      %p340 = por %p338, %p339
      %p341 = scmp.ne.s32.totalorder %s333, %s336
      %p342 = scmp.eq.s32.totalorder %s21, 0
      %p343 = por %p341, %p342
      %p344 = scmp.ne.s32.totalorder %s333, %s336
      %p345 = scmp.eq.s32.totalorder %s26, 1
      %p346 = por %p344, %p345
      %p347 = scmp.ne.s32.totalorder %s336, %s337
      %p348 = scmp.eq.s32.totalorder %s26, 0
      %p349 = por %p347, %p348
      %p350 = scmp.ne.s32.totalorder %s336, %s337
      %p351 = scmp.eq.s32.totalorder %s27, 1
      %p352 = por %p350, %p351
      %p354 = scmp.ne.s32.totalorder %s337, %s353
      %p355 = scmp.eq.s32.totalorder %s27, 0
      %p356 = por %p354, %p355
      %p357 = scmp.le.s32.totalorder 1, %s21
      %p358 = scmp.lt.s32.totalorder %s21, 3
      %p359 = pnand %p357, %p358
      %p360 = pneg %p359
      // Predicated region
      $region9: #{encoder_layer.5} parent=5 // pred_check
        _
      $region10: #{encoder_layer.5} parent=5 // pred_check_branch
        %362 = sbr.rel (%p359) target = $region12
      $region11: #{encoder_layer.5} parent=5 // pred_region
        %s363 = ssub.s32 %s21, 1
        // Predicated region
        $region13: #{encoder_layer.5} parent=11 // pred_check
          %p364 = pneg %p117
        $region14: #{encoder_layer.5} parent=11 // pred_check_branch
          %366 = sbr.rel (%p364) target = $region16
        $region15: #{encoder_layer.5} parent=11 // pred_region
          _
        $region16: #{encoder_layer.5} parent=11 // pred_fallthru
          _
        // Predicated region
        $region17: #{encoder_layer.5} parent=11 // pred_check
          %p367 = pneg %p138
        $region18: #{encoder_layer.5} parent=11 // pred_check_branch
          %369 = sbr.rel (%p367) target = $region20
        $region19: #{encoder_layer.5} parent=11 // pred_region
          _
        $region20: #{encoder_layer.5} parent=11 // pred_fallthru
          _
        // Predicated region
        $region21: #{encoder_layer.5} parent=11 // pred_check
          %p370 = pneg %p159
        $region22: #{encoder_layer.5} parent=11 // pred_check_branch
          %372 = sbr.rel (%p370) target = $region24
        $region23: #{encoder_layer.5} parent=11 // pred_region
          _
        $region24: #{encoder_layer.5} parent=11 // pred_fallthru
          _
        // Predicated region
        $region25: #{encoder_layer.5} parent=11 // pred_check
          %p373 = pneg %p180
        $region26: #{encoder_layer.5} parent=11 // pred_check_branch
          %375 = sbr.rel (%p373) target = $region28
        $region27: #{encoder_layer.5} parent=11 // pred_region
          _
        $region28: #{encoder_layer.5} parent=11 // pred_fallthru
          _
        // Predicated region
        $region29: #{encoder_layer.5} parent=11 // pred_check
          %p376 = pneg %p206
        $region30: #{encoder_layer.5} parent=11 // pred_check_branch
          %378 = sbr.rel (%p376) target = $region32
        $region31: #{encoder_layer.5} parent=11 // pred_region
          %p379 = scmp.lt.s32.totalorder %s33, 0
          %s380 = scalar_select %p379, %s33, 0
          %s381 = smul.addr %s380, 4
          %s382 = scalar_lea.vmem %s6, %s381
        $region32: #{encoder_layer.5} parent=11 // pred_fallthru
          _
        // Predicated region
        $region33: #{encoder_layer.5} parent=11 // pred_check
          %p383 = pneg %p232
        $region34: #{encoder_layer.5} parent=11 // pred_check_branch
          %385 = sbr.rel (%p383) target = $region36
        $region35: #{encoder_layer.5} parent=11 // pred_region
          %p386 = scmp.lt.s32.totalorder %s33, 0
          %s387 = scalar_select %p386, %s33, 0
          %s388 = scalar_lea.vmem %s7, %s387
        $region36: #{encoder_layer.5} parent=11 // pred_fallthru
          _
        // Predicated region
        $region37: #{encoder_layer.5} parent=11 // pred_check
          %p389 = pneg %p258
        $region38: #{encoder_layer.5} parent=11 // pred_check_branch
          %391 = sbr.rel (%p389) target = $region40
        $region39: #{encoder_layer.5} parent=11 // pred_region
          %s392 = smul.u32 8, %s33
          %p393 = scmp.lt.s32.totalorder %s392, 7
          %s394 = scalar_select %p393, %s392, 7
          %s395 = smul.addr %s394, 4
          %s396 = scalar_lea.vmem %s8, %s395
          %s397 = smul.u32 8, %s33
        $region40: #{encoder_layer.5} parent=11 // pred_fallthru
          _
        // Predicated region
        $region41: #{encoder_layer.5} parent=11 // pred_check
          %p398 = pneg %p279
        $region42: #{encoder_layer.5} parent=11 // pred_check_branch
          %400 = sbr.rel (%p398) target = $region44
        $region43: #{encoder_layer.5} parent=11 // pred_region
          _
        $region44: #{encoder_layer.5} parent=11 // pred_fallthru
          _
        // Predicated region
        $region45: #{encoder_layer.5} parent=11 // pred_check
          %p401 = pneg %p300
        $region46: #{encoder_layer.5} parent=11 // pred_check_branch
          %403 = sbr.rel (%p401) target = $region48
        $region47: #{encoder_layer.5} parent=11 // pred_region
          _
        $region48: #{encoder_layer.5} parent=11 // pred_fallthru
          _
        // Predicated region
        $region49: #{encoder_layer.5} parent=11 // pred_check
          %p404 = pneg %p321
        $region50: #{encoder_layer.5} parent=11 // pred_check_branch
          %406 = sbr.rel (%p404) target = $region52
        $region51: #{encoder_layer.5} parent=11 // pred_region
          _
        $region52: #{encoder_layer.5} parent=11 // pred_fallthru
          _
      $region12: #{encoder_layer.5} parent=5 // pred_fallthru
        _
      %p407 = scmp.lt.s32.totalorder %s21, 2
      // Predicated region
      $region53: #{encoder_layer.5} parent=5 // pred_check
        %p408 = pneg %p407
      $region54: #{encoder_layer.5} parent=5 // pred_check_branch
        %410 = sbr.rel (%p408) target = $region56
      $region55: #{encoder_layer.5} parent=5 // pred_region
        // Predicated region
        $region57: #{encoder_layer.5} parent=55 // pred_check
          %p411 = pneg %p62
        $region58: #{encoder_layer.5} parent=55 // pred_check_branch
          %413 = sbr.rel (%p411) target = $region60
        $region59: #{encoder_layer.5} parent=55 // pred_region
          %p414 = scmp.lt.s32.totalorder %s28, 1
          %s415 = scalar_select %p414, %s28, 1
          %p416 = scmp.lt.s32.totalorder %s29, 0
          %s417 = scalar_select %p416, %s29, 0
          %s418 = sadd.s32 %s417, %s415
          %s419 = smul.addr %s418, 4
          %s420 = scalar_lea.vmem %s0, %s419
        $region60: #{encoder_layer.5} parent=55 // pred_fallthru
          _
        // Predicated region
        $region61: #{encoder_layer.5} parent=55 // pred_check
          %p421 = pneg %p90
        $region62: #{encoder_layer.5} parent=55 // pred_check_branch
          %423 = sbr.rel (%p421) target = $region64
        $region63: #{encoder_layer.5} parent=55 // pred_region
          %p424 = scmp.lt.s32.totalorder %s28, 1
          %s425 = scalar_select %p424, %s28, 1
          %p426 = scmp.lt.s32.totalorder %s29, 0
          %s427 = scalar_select %p426, %s29, 0
          %s428 = sadd.s32 %s427, %s425
          %s429 = smul.addr %s428, 8
          %s430 = scalar_lea.vmem %s1, %s429
        $region64: #{encoder_layer.5} parent=55 // pred_fallthru
          _
      $region56: #{encoder_layer.5} parent=5 // pred_fallthru
        _
      %p431 = scmp.le.s32.totalorder 1, %s21
      %p432 = scmp.lt.s32.totalorder %s21, 3
      %p433 = pnand %p431, %p432
      %p434 = pneg %p433
      // Predicated region
      $region65: #{encoder_layer.5} parent=5 // pred_check
        _
      $region66: #{encoder_layer.5} parent=5 // pred_check_branch
        %436 = sbr.rel (%p433) target = $region68
      $region67: #{encoder_layer.5} parent=5 // pred_region
        %s437 = ssub.s32 %s21, 1
        %p438 = scmp.lt.s32.totalorder %s31, 1
        %s439 = scalar_select %p438, %s31, 1
        %p440 = scmp.lt.s32.totalorder %s32, 0
        %s441 = scalar_select %p440, %s32, 0
        %s442 = sadd.s32 %s441, %s439
        %s443 = smul.addr %s442, 4
        %s444 = scalar_lea.vmem %s0, %s443
        %p445 = pneg %p68
        %p446 = pneg %p65
        %p447 = scmp.lt.s32.totalorder %s31, 1
        %s448 = scalar_select %p447, %s31, 1
        %p449 = scmp.lt.s32.totalorder %s32, 0
        %s450 = scalar_select %p449, %s32, 0
        %s451 = sadd.s32 %s450, %s448
        %s452 = smul.addr %s451, 8
        %s453 = scalar_lea.vmem %s1, %s452
        %p454 = pneg %p96
        %p455 = pneg %p93
        %p456 = pneg %p117
        %p457 = pneg %p114
        %p458 = pneg %p138
        %p459 = pneg %p135
        %p460 = pneg %p159
        %p461 = pneg %p156
        %p462 = pneg %p180
        %p463 = pneg %p177
        %p464 = scmp.lt.s32.totalorder %s33, 0
        %s465 = scalar_select %p464, %s33, 0
        %s466 = smul.addr %s465, 4
        %s467 = scalar_lea.vmem %s6, %s466
        %p468 = pneg %p206
        %p469 = pneg %p203
        %p470 = scmp.lt.s32.totalorder %s33, 0
        %s471 = scalar_select %p470, %s33, 0
        %s472 = scalar_lea.vmem %s7, %s471
        %p473 = pneg %p232
        %p474 = pneg %p229
        %s475 = smul.u32 8, %s33
        %p476 = scmp.lt.s32.totalorder %s475, 7
        %s477 = scalar_select %p476, %s475, 7
        %s478 = smul.addr %s477, 4
        %s479 = scalar_lea.vmem %s8, %s478
        %p480 = pneg %p258
        %p481 = pneg %p255
        %p482 = pneg %p279
        %p483 = pneg %p276
        %p484 = pneg %p300
        %p485 = pneg %p297
        %p486 = pneg %p321
        %p487 = pneg %p318
        %p488 = pneg %p349
        %p489 = pneg %p346
        %s490 = sand.u32 %s336, 1
        %s491 = scalar_lea.sflag [#allocation5], %s490
        %s492 = sand.u32 %s336, 1
        %s493 = smul.addr %s492, 8
        %s494 = scalar_lea.vmem [#allocation4], %s493
        %p495 = scmp.lt.s32.totalorder %s31, 1
        %s496 = scalar_select %p495, %s31, 1
        %p497 = scmp.lt.s32.totalorder %s32, 0
        %s498 = scalar_select %p497, %s32, 0
        %s499 = sadd.s32 %s498, %s496
        %s500 = smul.addr %s499, 4
        %s501 = scalar_lea.vmem %s0, %s500
        %p502 = scmp.lt.s32.totalorder %s31, 1
        %s503 = scalar_select %p502, %s31, 1
        %p504 = scmp.lt.s32.totalorder %s32, 0
        %s505 = scalar_select %p504, %s32, 0
        %s506 = sadd.s32 %s505, %s503
        %s507 = smul.addr %s506, 8
        %s508 = scalar_lea.vmem %s1, %s507
        %p509 = scmp.lt.s32.totalorder %s33, 0
        %s510 = scalar_select %p509, %s33, 0
        %s511 = smul.addr %s510, 4
        %s512 = scalar_lea.vmem %s6, %s511
        %p513 = scmp.lt.s32.totalorder %s33, 0
        %s514 = scalar_select %p513, %s33, 0
        %s515 = scalar_lea.vmem %s7, %s514
        %s516 = smul.u32 8, %s33
        %p517 = scmp.lt.s32.totalorder %s516, 7
        %s518 = scalar_select %p517, %s516, 7
        %s519 = smul.addr %s518, 4
        %s520 = scalar_lea.vmem %s8, %s519
        %s521 = smul.u32 8, %s33
        %p523 = scmp.eq.s32.totalorder %s33, 0
        // Predicated region
        $region69: #{encoder_layer.5} parent=67 // pred_check
          %p524 = pneg %p523
        $region70: #{encoder_layer.5} parent=67 // pred_check_branch
          %526 = sbr.rel (%p524) target = $region72
        $region71: #{encoder_layer.5} parent=67 // pred_region
          %v527 = vld [vmem:[%s508] sm:$0xff]
          %v528 = vld [vmem:[%s501] sm:$0xf]
          %v529 = vld [vmem:[%s2] sm:$0xf]
          %v530 = vld [vmem:[%s2 + $0x4] sm:$0xf]
          %v531 = vld [vmem:[%s2 + $0x8] sm:$0xf]
          %v532 = vld [vmem:[%s2 + $0xc] sm:$0xf]
          %v533 = vld [vmem:[%s3] sm:$0x1]
          %v535 = vlaneseq
          %v536 = vshrl.u32 %v535, 7
          %v537 = vsub.s32 0, %v536
          %v538 = vrot.slane %v533, %v537
          %v544 = vunpack.c.l.b16 %v529
          %v545 = vunpack.c.l.b16 %v530
          %v546 = vunpack.c.l.b16 %v531
          %v547 = vunpack.c.l.b16 %v532
          %v548 = vpack.c.b16 %v545, %v544
          %v549 = vpack.c.b16 %v547, %v546
          %vm552 = vcmask 261120
          %v554 = vsel %vm552, %v528, 0
          %556 = vmatprep.subr.bf16.mxu0 0
          %557 = vmatpush1.bf16.msra.mxu0 0
          %558 = vmatprep.subr.bf16.mxu0 0
          %559 = vmatpush1.bf16.msra.mxu0 0
          %560 = vmatprep.subr.bf16.mxu0 0
          %561 = vmatpush1.bf16.msra.mxu0 0
          %562 = vmatprep.subr.bf16.mxu0 0
          %563 = vmatpush1.bf16.msra.mxu0 0
          %564 = vmatprep.subr.bf16.mxu0 0
          %565 = vmatpush1.bf16.msra.mxu0 0
          %566 = vmatprep.subr.bf16.mxu0 0
          %567 = vmatpush1.bf16.msra.mxu0 0
          %568 = vmatprep.subr.bf16.mxu0 0
          %569 = vmatpush1.bf16.msra.mxu0 %v549
          %570 = vmatprep.subr.bf16.mxu0 0
          %571 = vmatpush1.bf16.msra.mxu0 %v548
          %572 = vmatprep.subr.bf16.mxu0 0
          %573 = vmatpush2.bf16.msra.mxu0 0
          %574 = vmatprep.subr.bf16.mxu0 0
          %575 = vmatpush2.bf16.msra.mxu0 0
          %576 = vmatprep.subr.bf16.mxu0 0
          %577 = vmatpush2.bf16.msra.mxu0 0
          %578 = vmatprep.subr.bf16.mxu0 0
          %579 = vmatpush2.bf16.msra.mxu0 0
          %580 = vmatprep.subr.bf16.mxu0 0
          %581 = vmatpush2.bf16.msra.mxu0 0
          %582 = vmatprep.subr.bf16.mxu0 0
          %583 = vmatpush2.bf16.msra.mxu0 0
          %584 = vmatprep.subr.bf16.mxu0 0
          %585 = vmatpush2.bf16.msra.mxu0 0
          %586 = vmatprep.subr.bf16.mxu0 0
          %587 = vmatpush2.bf16.msra.mxu0 0
          %588 = vmatprep.mubr.bf16.mxu0 0
          %589 = vmatmul.mubr.bf16.gmra.mxu0 %v554
          %v590 = vpop.f32.mrf.mxu0
          %v591 = vadd.f32 %v538, %v590
          %v592 = vpop.f32.mrf.mxu0
          %v593 = vpop.f32.mrf.mxu0
          %v594 = vpop.f32.mrf.mxu0
          %595 = vdwg.mxu0
          %v596 = vadd.f32 %v527, %v591
          %v597 = vld [vmem:[%s4] sm:$0x1]
          %v598 = vld [vmem:[%s5] sm:$0x1]
          %v599 = vsel %vm552, %v596, 0.0
          %600 = vadd.xlane.f32.xlu0 %v599
          %v601 = vpop.xlane.xlu0 %600
          %v602 = vrcp.pop 32.0
          %v603 = vmul.f32 %v601, %v602
          %v604 = vsub.f32 %v596, %v603
          %v605 = vmul.f32 %v604, %v604
          %v606 = vsel %vm552, %v605, 0.0
          %607 = vadd.xlane.f32.xlu0 %v606
          %v608 = vpop.xlane.xlu0 %607
          %v609 = vmul.f32 %v608, %v602
          %v610 = vadd.f32 %v609, 1e-05
          %v611 = vrsqrt.pop %v610
          %v612 = vmul.f32 %v604, %v611
          %v614 = vlaneseq
          %v615 = vshrl.u32 %v614, 7
          %v616 = vsub.s32 0, %v615
          %v617 = vrot.slane %v597, %v616
          %v619 = vmul.f32 %v612, %v617
          %v621 = vlaneseq
          %v622 = vshrl.u32 %v621, 7
          %v623 = vsub.s32 0, %v622
          %v624 = vrot.slane %v598, %v623
          %v626 = vadd.f32 %v619, %v624
          %627 = vst.msk [vmem:[#allocation2] sm:$0xff] %vm552, %v626
          %628 = vst.msk [vmem:[#allocation3] sm:$0xff] %vm552, 0.0
        $region72: #{encoder_layer.5} parent=67 // pred_fallthru
          _
        %v629 = vld [vmem:[#allocation2] sm:$0xff]
        %v630 = vpack.c.bf16 %v629, %v629
        %v631 = vld [vmem:[%s512] sm:$0xf]
        %v632 = vld [vmem:[%s512 + $0x4] sm:$0xf]
        %v633 = vld [vmem:[%s512 + $0x8] sm:$0xf]
        %v634 = vld [vmem:[%s512 + $0xc] sm:$0xf]
        %v635 = vld [vmem:[%s515] sm:$0x1]
        %v637 = vlaneseq
        %v638 = vshrl.u32 %v637, 7
        %v639 = vsub.s32 0, %v638
        %v640 = vrot.slane %v635, %v639
        %v646 = vunpack.c.l.b16 %v631
        %v647 = vunpack.c.l.b16 %v632
        %v648 = vunpack.c.l.b16 %v633
        %v649 = vunpack.c.l.b16 %v634
        %v650 = vpack.c.b16 %v647, %v646
        %v651 = vpack.c.b16 %v649, %v648
        %vm654 = vcmask 261120
        %v656 = vsel %vm654, %v630, 0
        %658 = vmatprep.subr.bf16.mxu0 0
        %659 = vmatpush1.bf16.msra.mxu0 0
        %660 = vmatprep.subr.bf16.mxu0 0
        %661 = vmatpush1.bf16.msra.mxu0 0
        %662 = vmatprep.subr.bf16.mxu0 0
        %663 = vmatpush1.bf16.msra.mxu0 0
        %664 = vmatprep.subr.bf16.mxu0 0
        %665 = vmatpush1.bf16.msra.mxu0 0
        %666 = vmatprep.subr.bf16.mxu0 0
        %667 = vmatpush1.bf16.msra.mxu0 0
        %668 = vmatprep.subr.bf16.mxu0 0
        %669 = vmatpush1.bf16.msra.mxu0 0
        %670 = vmatprep.subr.bf16.mxu0 0
        %671 = vmatpush1.bf16.msra.mxu0 %v651
        %672 = vmatprep.subr.bf16.mxu0 0
        %673 = vmatpush1.bf16.msra.mxu0 %v650
        %674 = vmatprep.subr.bf16.mxu0 0
        %675 = vmatpush2.bf16.msra.mxu0 0
        %676 = vmatprep.subr.bf16.mxu0 0
        %677 = vmatpush2.bf16.msra.mxu0 0
        %678 = vmatprep.subr.bf16.mxu0 0
        %679 = vmatpush2.bf16.msra.mxu0 0
        %680 = vmatprep.subr.bf16.mxu0 0
        %681 = vmatpush2.bf16.msra.mxu0 0
        %682 = vmatprep.subr.bf16.mxu0 0
        %683 = vmatpush2.bf16.msra.mxu0 0
        %684 = vmatprep.subr.bf16.mxu0 0
        %685 = vmatpush2.bf16.msra.mxu0 0
        %686 = vmatprep.subr.bf16.mxu0 0
        %687 = vmatpush2.bf16.msra.mxu0 0
        %688 = vmatprep.subr.bf16.mxu0 0
        %689 = vmatpush2.bf16.msra.mxu0 0
        %690 = vmatprep.mubr.bf16.mxu0 0
        %691 = vmatmul.mubr.bf16.gmra.mxu0 %v656
        %v692 = vpop.f32.mrf.mxu0
        %v693 = vadd.f32 %v640, %v692
        %v694 = vpop.f32.mrf.mxu0
        %v695 = vpop.f32.mrf.mxu0
        %v696 = vpop.f32.mrf.mxu0
        %697 = vdwg.mxu0
        %v698 = vmax.f32 %v693, 0.0
        %v699 = vld [vmem:[#allocation3] sm:$0xff]
        %v700 = vpack.c.bf16 %v698, %v698
        %v701 = vld [vmem:[%s520] sm:$0xf]
        %v702 = vld [vmem:[%s520 + $0x4] sm:$0xf]
        %v703 = vld [vmem:[%s520 + $0x8] sm:$0xf]
        %v704 = vld [vmem:[%s520 + $0xc] sm:$0xf]
        %v705 = vld [vmem:[%s520 + $0x10] sm:$0xf]
        %v706 = vld [vmem:[%s520 + $0x14] sm:$0xf]
        %v707 = vld [vmem:[%s520 + $0x18] sm:$0xf]
        %v708 = vld [vmem:[%s520 + $0x1c] sm:$0xf]
        %v717 = vunpack.c.l.b16 %v701
        %v718 = vunpack.c.l.b16 %v702
        %v719 = vunpack.c.l.b16 %v703
        %v720 = vunpack.c.l.b16 %v704
        %v721 = vunpack.c.l.b16 %v705
        %v722 = vunpack.c.l.b16 %v706
        %v723 = vunpack.c.l.b16 %v707
        %v724 = vunpack.c.l.b16 %v708
        %v725 = vpack.c.b16 %v718, %v717
        %v726 = vpack.c.b16 %v720, %v719
        %v727 = vpack.c.b16 %v722, %v721
        %v728 = vpack.c.b16 %v724, %v723
        %vm733 = vcmask 523264
        %v735 = vsel %vm733, %v700, 0
        %737 = vmatprep.subr.bf16.mxu0 0
        %738 = vmatpush1.bf16.msra.mxu0 0
        %739 = vmatprep.subr.bf16.mxu0 0
        %740 = vmatpush1.bf16.msra.mxu0 0
        %741 = vmatprep.subr.bf16.mxu0 0
        %742 = vmatpush1.bf16.msra.mxu0 0
        %743 = vmatprep.subr.bf16.mxu0 0
        %744 = vmatpush1.bf16.msra.mxu0 0
        %745 = vmatprep.subr.bf16.mxu0 0
        %746 = vmatpush1.bf16.msra.mxu0 %v728
        %747 = vmatprep.subr.bf16.mxu0 0
        %748 = vmatpush1.bf16.msra.mxu0 %v727
        %749 = vmatprep.subr.bf16.mxu0 0
        %750 = vmatpush1.bf16.msra.mxu0 %v726
        %751 = vmatprep.subr.bf16.mxu0 0
        %752 = vmatpush1.bf16.msra.mxu0 %v725
        %753 = vmatprep.subr.bf16.mxu0 0
        %754 = vmatpush2.bf16.msra.mxu0 0
        %755 = vmatprep.subr.bf16.mxu0 0
        %756 = vmatpush2.bf16.msra.mxu0 0
        %757 = vmatprep.subr.bf16.mxu0 0
        %758 = vmatpush2.bf16.msra.mxu0 0
        %759 = vmatprep.subr.bf16.mxu0 0
        %760 = vmatpush2.bf16.msra.mxu0 0
        %761 = vmatprep.subr.bf16.mxu0 0
        %762 = vmatpush2.bf16.msra.mxu0 0
        %763 = vmatprep.subr.bf16.mxu0 0
        %764 = vmatpush2.bf16.msra.mxu0 0
        %765 = vmatprep.subr.bf16.mxu0 0
        %766 = vmatpush2.bf16.msra.mxu0 0
        %767 = vmatprep.subr.bf16.mxu0 0
        %768 = vmatpush2.bf16.msra.mxu0 0
        %769 = vmatprep.mubr.bf16.mxu0 0
        %770 = vmatmul.mubr.bf16.gmra.mxu0 %v735
        %v771 = vpop.f32.mrf.mxu0
        %v772 = vadd.f32 0.0, %v771
        %v773 = vpop.f32.mrf.mxu0
        %v774 = vpop.f32.mrf.mxu0
        %v775 = vpop.f32.mrf.mxu0
        %776 = vdwg.mxu0
        %v777 = vadd.f32 %v699, %v772
        %778 = vst.msk [vmem:[#allocation3] sm:$0xff] %vm654, %v777
        // Predicated region
        $region73: #{encoder_layer.5} parent=67 // pred_check
          %p779 = pneg %p523
        $region74: #{encoder_layer.5} parent=67 // pred_check_branch
          %781 = sbr.rel (%p779) target = $region76
        $region75: #{encoder_layer.5} parent=67 // pred_region
          %v782 = vld [vmem:[#allocation3] sm:$0xff]
          %v783 = vld [vmem:[%s9] sm:$0x1]
          %v785 = vlaneseq
          %v786 = vshrl.u32 %v785, 7
          %v787 = vsub.s32 0, %v786
          %v788 = vrot.slane %v783, %v787
          %v790 = vadd.f32 %v782, %v788
          %v791 = vld [vmem:[#allocation2] sm:$0xff]
          %v792 = vadd.f32 %v791, %v790
          %v793 = vld [vmem:[%s10] sm:$0x1]
          %v794 = vld [vmem:[%s11] sm:$0x1]
          %v795 = vsel %vm654, %v792, 0.0
          %796 = vadd.xlane.f32.xlu0 %v795
          %v797 = vpop.xlane.xlu0 %796
          %v798 = vrcp.pop 32.0
          %v799 = vmul.f32 %v797, %v798
          %v800 = vsub.f32 %v792, %v799
          %v801 = vmul.f32 %v800, %v800
          %v802 = vsel %vm654, %v801, 0.0
          %803 = vadd.xlane.f32.xlu0 %v802
          %v804 = vpop.xlane.xlu0 %803
          %v805 = vmul.f32 %v804, %v798
          %v806 = vadd.f32 %v805, 1e-05
          %v807 = vrsqrt.pop %v806
          %v808 = vmul.f32 %v800, %v807
          %v810 = vlaneseq
          %v811 = vshrl.u32 %v810, 7
          %v812 = vsub.s32 0, %v811
          %v813 = vrot.slane %v793, %v812
          %v815 = vmul.f32 %v808, %v813
          %v817 = vlaneseq
          %v818 = vshrl.u32 %v817, 7
          %v819 = vsub.s32 0, %v818
          %v820 = vrot.slane %v794, %v819
          %v822 = vadd.f32 %v815, %v820
          %823 = vst.msk [vmem:[%s494] sm:$0xff] %vm654, %v822
        $region76: #{encoder_layer.5} parent=67 // pred_fallthru
          _
        %s824 = sand.u32 %s336, 1
        %s825 = scalar_lea.sflag [#allocation5], %s824
        %s826 = sand.u32 %s336, 1
        %s827 = smul.addr %s826, 8
        %s828 = scalar_lea.vmem [#allocation4], %s827
        // Predicated region
        $region77: #{encoder_layer.5} parent=67 // pred_check
          %p829 = pneg %p346
        $region78: #{encoder_layer.5} parent=67 // pred_check_branch
          %831 = sbr.rel (%p829) target = $region80
        $region79: #{encoder_layer.5} parent=67 // pred_region
          %s833 = ssub.s32 128, 128
          %834 = vsyncadd %s825, %s833
          %s835 = sadd.s32 %s32, %s31
          %s836 = smul.addr %s835, 128
          %s837 = scalar_lea.hbm %s12, %s836
          %s839 = sshll.u32 %s828, 4
          %s840 = int_to_ptr.vmem [resolvable:$true] %s839
          %842 = dma.vmem_to_hbm [thread:$0]  %s840, 128, %s837, %s825
        $region80: #{encoder_layer.5} parent=67 // pred_fallthru
          _
      $region68: #{encoder_layer.5} parent=5 // pred_fallthru
        _
      %p843 = scmp.le.s32.totalorder 2, %s21
      // Predicated region
      $region81: #{encoder_layer.5} parent=5 // pred_check
        %p844 = pneg %p843
      $region82: #{encoder_layer.5} parent=5 // pred_check_branch
        %846 = sbr.rel (%p844) target = $region84
      $region83: #{encoder_layer.5} parent=5 // pred_region
        %s847 = ssub.s32 %s21, 2
        // Predicated region
        $region85: #{encoder_layer.5} parent=83 // pred_check
          %p848 = pneg %p352
        $region86: #{encoder_layer.5} parent=83 // pred_check_branch
          %850 = sbr.rel (%p848) target = $region88
        $region87: #{encoder_layer.5} parent=83 // pred_region
          %s851 = sand.u32 %s337, 1
          %s852 = scalar_lea.sflag [#allocation5], %s851
          %s853 = sand.u32 %s337, 1
          %s854 = smul.addr %s853, 8
          %s855 = scalar_lea.vmem [#allocation4], %s854
          %856 = dma.done %s852, 128
        $region88: #{encoder_layer.5} parent=83 // pred_fallthru
          _
      $region84: #{encoder_layer.5} parent=5 // pred_fallthru
        _
    $region6: #{encoder_layer.5} parent=1 // loop_footer
      %s25 = sadd.s32 1, %s21
    $region7: #{encoder_layer.5} parent=1 // loop_footer_branch
      %20 = sbr.rel target = $region3
    $region8: #{encoder_layer.5} parent=1 // loop_exit
      _
    %857 = vsyncpa [#allocation5], 1
    %s858 = scalar_lea.sflag [#allocation5], 1
    %859 = vsyncpa %s858, 1

</llo_original>
